<compile_context>
chip_gen: v6e
topology: v6e:2x2x1
jax: 0.10.0
libtpu: 0.0.40
codegen_flags: <defaults>
</compile_context>

<pallas_src>
import functools
import math

import jax
import jax.numpy as jnp
from jax import lax
from jax.experimental import pallas as pl
from jax.experimental.pallas import tpu as pltpu

# ----------------------------- model config ---------------------------------
VOCAB = 128                 # multiple of 128 -> lane-dense logits store
HIDDEN = 32
N_HEADS = 4
HEAD_DIM = HIDDEN // N_HEADS
N_LAYERS = 2
FFN = 64
LORA_R = 64                 # LoraConfig(r=64)
LORA_ALPHA = 16             # LoraConfig(lora_alpha=16)
LORA_SCALE = LORA_ALPHA / LORA_R
EPS = 1e-6
NEG_INF = -1e30             # must stay f32 (bf16 would become -inf -> NaN risk)
# TODO(synk): lora_dropout=0.1 is a training-time op; forward here is the
# eval-mode (identity-dropout) path, which is also what makes the LoRA merge
# (W + scale * A @ B) mathematically exact.


# --------------------------- fused Pallas kernel -----------------------------
def _fused_forward_kernel(ids_ref, embed_ref, ln1_ref, wqkv_ref, wo_ref,
                          ln2_ref, wu_ref, wd_ref, lnf_ref, head_ref,
                          o_ref, *, seq):
    # ---- embedding gather inside the kernel: one-hot @ table on the MXU ----
    ids = ids_ref[0]                                            # (S, 1) int32
    vocab_iota = lax.broadcasted_iota(jnp.int32, (seq, VOCAB), 1)
    onehot = (ids == vocab_iota).astype(jnp.float32)            # (S, VOCAB)
    x = jnp.dot(onehot, embed_ref[...],
                preferred_element_type=jnp.float32)             # (S, H) f32

    # ---- causal mask generated in-kernel (no (T,T) HBM constant) ----
    row = lax.broadcasted_iota(jnp.int32, (seq, seq), 0)
    col = lax.broadcasted_iota(jnp.int32, (seq, seq), 1)
    causal = row >= col

    def rms(v, g):                      # f32 VPU/EUP math (v5e-safe)
        ms = jnp.mean(v * v, axis=-1, keepdims=True)
        return v * lax.rsqrt(ms + EPS) * g

    for li in range(N_LAYERS):          # static unroll: still ONE kernel launch
        h = rms(x, ln1_ref[li])
        # fused q/k/v projection: one (S,32)@(32,96) bf16 MXU pass.
        # 1/sqrt(head_dim) is folded into the q columns at weight-prep time.
        qkv = jnp.dot(h.astype(jnp.bfloat16), wqkv_ref[li],
                      preferred_element_type=jnp.float32)       # (S, 3H) f32
        qkv_b = qkv.astype(jnp.bfloat16)                        # cast ONCE

        head_outs = []
        for hd in range(N_HEADS):       # heads unrolled (tiny dims)
            lo = hd * HEAD_DIM
            qh = qkv_b[:, lo:lo + HEAD_DIM]
            kh = qkv_b[:, HIDDEN + lo:HIDDEN + lo + HEAD_DIM]
            vh = qkv_b[:, 2 * HIDDEN + lo:2 * HIDDEN + lo + HEAD_DIM]
            # per-batch (S,S) scores; scale already folded into wq.
            s = lax.dot_general(qh, kh, (((1,), (1,)), ((), ())),
                                preferred_element_type=jnp.float32)
            s = jnp.where(causal, s, NEG_INF)                   # f32 scores
            m = jnp.max(s, axis=-1, keepdims=True)
            p = jnp.exp(s - m)
            # approx reciprocal runs on the EUP (free slot); ~1e-3 rel. error,
            # well inside the test tolerance.
            p = p * pl.reciprocal(jnp.sum(p, axis=-1, keepdims=True),
                                  approx=True)
            head_outs.append(jnp.dot(p.astype(jnp.bfloat16), vh,
                                     preferred_element_type=jnp.float32))

        # single output projection: concat heads -> one (S,32)@(32,32) matmul.
        attn = jnp.concatenate(head_outs, axis=-1).astype(jnp.bfloat16)
        x = x + jnp.dot(attn, wo_ref[li],
                        preferred_element_type=jnp.float32)     # residual

        h2 = rms(x, ln2_ref[li])
        u = jax.nn.gelu(jnp.dot(h2.astype(jnp.bfloat16), wu_ref[li],
                                preferred_element_type=jnp.float32))
        x = x + jnp.dot(u.astype(jnp.bfloat16), wd_ref[li],
                        preferred_element_type=jnp.float32)     # residual

    xf = rms(x, lnf_ref[...])
    # (S, VOCAB=128) lane-dense store.
    o_ref[0] = jnp.dot(xf.astype(jnp.bfloat16), head_ref[...],
                       preferred_element_type=jnp.float32)
    # TODO(synk): if scaled beyond toy dims, tile attention flash-style over
    # query blocks and size tiles against v7x's 64 MiB VMEM.


# ------------------------------ parameters -----------------------------------
def init_params(key):
    def nrm(k, shape, scale=0.02):
        return (scale * jax.random.normal(k, shape)).astype(jnp.float32)

    keys = jax.random.split(key, 2 + N_LAYERS)
    params = {
        "embed": nrm(keys[0], (VOCAB, HIDDEN)),
        "ln_f": jnp.ones((1, HIDDEN), jnp.float32),
        "lm_head": nrm(keys[1], (HIDDEN, VOCAB)),
        "layers": [],
    }
    for li in range(N_LAYERS):
        lk = jax.random.split(keys[2 + li], 10)
        # NOTE: PEFT's default LoRA init sets B = 0; here B is small-random so
        # the adapter path is exercised numerically in this synthetic model.
        params["layers"].append({
            "ln1": jnp.ones((1, HIDDEN), jnp.float32),
            "wq": nrm(lk[0], (HIDDEN, HIDDEN)),
            "wq_a": nrm(lk[1], (HIDDEN, LORA_R)),
            "wq_b": nrm(lk[2], (LORA_R, HIDDEN)),
            "wk": nrm(lk[3], (HIDDEN, HIDDEN)),
            "wv": nrm(lk[4], (HIDDEN, HIDDEN)),
            "wv_a": nrm(lk[5], (HIDDEN, LORA_R)),
            "wv_b": nrm(lk[6], (LORA_R, HIDDEN)),
            "wo": nrm(lk[7], (HIDDEN, HIDDEN)),
            "ln2": jnp.ones((1, HIDDEN), jnp.float32),
            "w_up": nrm(lk[8], (HIDDEN, FFN)),
            "w_down": nrm(lk[9], (FFN, HIDDEN)),
        })
    return params


def prepare_kernel_params(params):
    """Merge LoRA adapters into base weights (exact in eval mode), fuse q/k/v
    into a single (HIDDEN, 3*HIDDEN) weight with 1/sqrt(head_dim) folded into
    the q columns, stack per-layer weights along a leading layer axis, and cast
    matmul weights to bf16 for the MXU."""
    bf = jnp.bfloat16
    inv_sqrt_d = 1.0 / math.sqrt(HEAD_DIM)

    wqkv, wo, wu, wd, ln1, ln2 = [], [], [], [], [], []
    for l in params["layers"]:
        wq = (l["wq"] + LORA_SCALE * (l["wq_a"] @ l["wq_b"])) * inv_sqrt_d
        wv = l["wv"] + LORA_SCALE * (l["wv_a"] @ l["wv_b"])
        wqkv.append(jnp.concatenate([wq, l["wk"], wv], axis=1))  # (H, 3H)
        wo.append(l["wo"])
        wu.append(l["w_up"])
        wd.append(l["w_down"])
        ln1.append(l["ln1"])
        ln2.append(l["ln2"])

    return {
        "embed": params["embed"].astype(jnp.float32),        # exact one-hot gather
        "ln1": jnp.stack(ln1),                                # (L, 1, H) f32
        "ln2": jnp.stack(ln2),                                # (L, 1, H) f32
        "wqkv": jnp.stack(wqkv).astype(bf),                   # (L, H, 3H) bf16
        "wo": jnp.stack(wo).astype(bf),                       # (L, H, H)  bf16
        "w_up": jnp.stack(wu).astype(bf),                     # (L, H, F)  bf16
        "w_down": jnp.stack(wd).astype(bf),                   # (L, F, H)  bf16
        "ln_f": params["ln_f"],                               # (1, H) f32
        "lm_head": params["lm_head"].astype(bf),              # (H, V) bf16
    }


# ------------------------------- forward -------------------------------------
def peft_causal_lm_forward(kparams, input_ids):
    """Equivalent of CausalLMPEFTModel.forward(input_id) -> tuple (logits,)."""
    batch, seq = input_ids.shape
    ids = input_ids.reshape(batch, seq, 1).astype(jnp.int32)

    kernel = functools.partial(_fused_forward_kernel, seq=seq)

    def full_spec(a):
        nd = a.ndim
        return pl.BlockSpec(a.shape, lambda b, _n=nd: (0,) * _n)

    grid_spec = pltpu.PrefetchScalarGridSpec(
        num_scalar_prefetch=0,
        grid=(batch,),
        in_specs=[
            pl.BlockSpec((1, seq, 1), lambda b: (b, 0, 0)),    # input ids
            full_spec(kparams["embed"]),
            full_spec(kparams["ln1"]),
            full_spec(kparams["wqkv"]),
            full_spec(kparams["wo"]),
            full_spec(kparams["ln2"]),
            full_spec(kparams["w_up"]),
            full_spec(kparams["w_down"]),
            full_spec(kparams["ln_f"]),
            full_spec(kparams["lm_head"]),
        ],
        out_specs=pl.BlockSpec((1, seq, VOCAB), lambda b: (b, 0, 0)),
    )

    logits = pl.pallas_call(
        kernel,
        out_shape=jax.ShapeDtypeStruct((batch, seq, VOCAB), jnp.float32),
        grid_spec=grid_spec,
        compiler_params=pltpu.CompilerParams(
            dimension_semantics=("parallel",)),   # batch shards across TCs (v7x)
    )(ids, kparams["embed"], kparams["ln1"], kparams["wqkv"], kparams["wo"],
      kparams["ln2"], kparams["w_up"], kparams["w_down"], kparams["ln_f"],
      kparams["lm_head"])

    return (logits,)   # return_dict=False -> tuple


# -------------------------- pure-JAX reference --------------------------------
def reference_forward(params, input_ids):
    batch, seq = input_ids.shape
    x = jnp.take(params["embed"], input_ids, axis=0).astype(jnp.float32)

    def rms(v, g):
        return v * jax.lax.rsqrt(jnp.mean(v * v, -1, keepdims=True) + EPS) * g

    for layer in params["layers"]:
        h = rms(x, layer["ln1"])
        q = h @ layer["wq"] + LORA_SCALE * ((h @ layer["wq_a"]) @ layer["wq_b"])
        k = h @ layer["wk"]
        v = h @ layer["wv"] + LORA_SCALE * ((h @ layer["wv_a"]) @ layer["wv_b"])

        def heads(tn):
            return tn.reshape(batch, seq, N_HEADS, HEAD_DIM).transpose(0, 2, 1, 3)

        qh, kh, vh = heads(q), heads(k), heads(v)
        s = jnp.einsum("bhqd,bhkd->bhqk", qh, kh) / math.sqrt(HEAD_DIM)
        causal = jnp.tril(jnp.ones((seq, seq), bool))
        s = jnp.where(causal, s, -1e30)
        p = jax.nn.softmax(s, axis=-1)
        o = jnp.einsum("bhqk,bhkd->bhqd", p, vh)
        o = o.transpose(0, 2, 1, 3).reshape(batch, seq, HIDDEN)
        x = x + o @ layer["wo"]

        h2 = rms(x, layer["ln2"])
        x = x + jax.nn.gelu(h2 @ layer["w_up"]) @ layer["w_down"]

    x = rms(x, params["ln_f"])
    return x @ params["lm_head"]


# --------------------------------- main ---------------------------------------
if __name__ == "__main__":
    key = jax.random.PRNGKey(0)
    pkey, dkey = jax.random.split(key)
    params = init_params(pkey)
    kparams = prepare_kernel_params(params)

    batch, seq = 2, 8
    input_ids = jax.random.randint(dkey, (batch, seq), 0, VOCAB, dtype=jnp.int32)

    forward = jax.jit(peft_causal_lm_forward)
    out = forward(kparams, input_ids)
    logits = jax.block_until_ready(out[0])

    assert logits.shape == (batch, seq, VOCAB)
    assert logits.dtype == jnp.float32
    assert bool(jnp.all(jnp.isfinite(logits)))

    ref = reference_forward(params, input_ids)
    err = float(jnp.max(jnp.abs(logits - ref)))
    assert bool(jnp.allclose(logits, ref, atol=3e-2, rtol=3e-2)), err

    print("KERNEL_OK")
</pallas_src>

<mosaic_0001>
module attributes {stable_mosaic.version = 11 : i64} {
  func.func @_fused_forward_kernel(%arg0: i32, %arg1: memref<1x8x1xi32, #tpu.memory_space<vmem>>, %arg2: memref<128x32xf32, #tpu.memory_space<vmem>>, %arg3: memref<2x1x32xf32, #tpu.memory_space<vmem>>, %arg4: memref<2x32x96xbf16, #tpu.memory_space<vmem>>, %arg5: memref<2x32x32xbf16, #tpu.memory_space<vmem>>, %arg6: memref<2x1x32xf32, #tpu.memory_space<vmem>>, %arg7: memref<2x32x64xbf16, #tpu.memory_space<vmem>>, %arg8: memref<2x64x32xbf16, #tpu.memory_space<vmem>>, %arg9: memref<1x32xf32, #tpu.memory_space<vmem>>, %arg10: memref<32x128xbf16, #tpu.memory_space<vmem>>, %arg11: memref<1x8x128xf32, #tpu.memory_space<vmem>>) attributes {dimension_semantics = [#tpu.dimension_semantics<parallel>], iteration_bounds = array<i64: 2>, scalar_prefetch = 0 : i64, scratch_operands = 0 : i64, tpu.core_type = #tpu.core_type<tc>, window_params = [{transform_indices = @transform_0, window_bounds = array<i64: 1, 8, 1>}, {pipeline_mode = #tpu.pipeline_mode<synchronous>, transform_indices = @transform_1, window_bounds = array<i64: 128, 32>}, {pipeline_mode = #tpu.pipeline_mode<synchronous>, transform_indices = @transform_2, window_bounds = array<i64: 2, 1, 32>}, {pipeline_mode = #tpu.pipeline_mode<synchronous>, transform_indices = @transform_3, window_bounds = array<i64: 2, 32, 96>}, {pipeline_mode = #tpu.pipeline_mode<synchronous>, transform_indices = @transform_4, window_bounds = array<i64: 2, 32, 32>}, {pipeline_mode = #tpu.pipeline_mode<synchronous>, transform_indices = @transform_5, window_bounds = array<i64: 2, 1, 32>}, {pipeline_mode = #tpu.pipeline_mode<synchronous>, transform_indices = @transform_6, window_bounds = array<i64: 2, 32, 64>}, {pipeline_mode = #tpu.pipeline_mode<synchronous>, transform_indices = @transform_7, window_bounds = array<i64: 2, 64, 32>}, {pipeline_mode = #tpu.pipeline_mode<synchronous>, transform_indices = @transform_8, window_bounds = array<i64: 1, 32>}, {pipeline_mode = #tpu.pipeline_mode<synchronous>, transform_indices = @transform_9, window_bounds = array<i64: 32, 128>}, {transform_indices = @transform_10, window_bounds = array<i64: 1, 8, 128>}]} {
    %c0 = arith.constant 0 : index
    %c0_0 = arith.constant 0 : index
    %c0_1 = arith.constant 0 : index
    %0 = vector.load %arg1[%c0, %c0_0, %c0_1] : memref<1x8x1xi32, #tpu.memory_space<vmem>>, vector<1x8x1xi32>
    %1 = vector.shape_cast %0 : vector<1x8x1xi32> to vector<8x1xi32>
    %2 = tpu.iota {dimensions = array<i32: 1>} : vector<8x128xi32>
    %3 = vector.broadcast %1 : vector<8x1xi32> to vector<8x128xi32>
    %4 = arith.cmpi eq, %3, %2 : vector<8x128xi32>
    %5 = arith.extui %4 : vector<8x128xi1> to vector<8x128xi32>
    %6 = arith.sitofp %5 : vector<8x128xi32> to vector<8x128xf32>
    %c0_2 = arith.constant 0 : index
    %c0_3 = arith.constant 0 : index
    %7 = vector.load %arg2[%c0_2, %c0_3] : memref<128x32xf32, #tpu.memory_space<vmem>>, vector<128x32xf32>
    %cst = arith.constant dense<0.000000e+00> : vector<8x32xf32>
    %8 = tpu.matmul %6, %7, %cst {dimension_numbers = #tpu.dot_dimension_numbers<[1], [0], [0], [1], [0, 0, 1, 1], [], []>} : vector<8x128xf32>, vector<128x32xf32>, vector<8x32xf32> -> vector<8x32xf32>
    %9 = tpu.iota {dimensions = array<i32: 0>} : vector<8x8xi32>
    %10 = tpu.iota {dimensions = array<i32: 1>} : vector<8x8xi32>
    %11 = arith.cmpi sge, %9, %10 : vector<8x8xi32>
    %c0_4 = arith.constant 0 : index
    %c0_5 = arith.constant 0 : index
    %c0_6 = arith.constant 0 : index
    %12 = vector.load %arg3[%c0_4, %c0_5, %c0_6] : memref<2x1x32xf32, #tpu.memory_space<vmem>>, vector<1x1x32xf32>
    %13 = vector.shape_cast %12 : vector<1x1x32xf32> to vector<1x32xf32>
    %14 = arith.mulf %8, %8 : vector<8x32xf32>
    %cst_7 = arith.constant dense<0.000000e+00> : vector<8xf32>
    %15 = vector.multi_reduction <add>, %14, %cst_7 [1] : vector<8x32xf32> to vector<8xf32>
    %16 = vector.shape_cast %15 : vector<8xf32> to vector<8x1xf32>
    %cst_8 = arith.constant 3.200000e+01 : f32
    %17 = vector.broadcast %cst_8 : f32 to vector<8x1xf32>
    %18 = arith.divf %16, %17 : vector<8x1xf32>
    %cst_9 = arith.constant 9.99999997E-7 : f32
    %19 = vector.broadcast %cst_9 : f32 to vector<8x1xf32>
    %20 = arith.addf %18, %19 : vector<8x1xf32>
    %21 = math.rsqrt %20 : vector<8x1xf32>
    %22 = vector.broadcast %21 : vector<8x1xf32> to vector<8x32xf32>
    %23 = arith.mulf %8, %22 : vector<8x32xf32>
    %24 = vector.broadcast %13 : vector<1x32xf32> to vector<8x32xf32>
    %25 = arith.mulf %23, %24 : vector<8x32xf32>
    %26 = arith.truncf %25 : vector<8x32xf32> to vector<8x32xbf16>
    %c0_10 = arith.constant 0 : index
    %c0_11 = arith.constant 0 : index
    %c0_12 = arith.constant 0 : index
    %27 = vector.load %arg4[%c0_10, %c0_11, %c0_12] : memref<2x32x96xbf16, #tpu.memory_space<vmem>>, vector<1x32x96xbf16>
    %28 = vector.shape_cast %27 : vector<1x32x96xbf16> to vector<32x96xbf16>
    %cst_13 = arith.constant dense<0.000000e+00> : vector<8x96xf32>
    %29 = tpu.matmul %26, %28, %cst_13 {dimension_numbers = #tpu.dot_dimension_numbers<[1], [0], [0], [1], [0, 0, 1, 1], [], []>} : vector<8x32xbf16>, vector<32x96xbf16>, vector<8x96xf32> -> vector<8x96xf32>
    %30 = arith.truncf %29 : vector<8x96xf32> to vector<8x96xbf16>
    %31 = vector.extract_strided_slice %30 {offsets = [0, 0], sizes = [8, 8], strides = [1, 1]} : vector<8x96xbf16> to vector<8x8xbf16>
    %32 = vector.extract_strided_slice %30 {offsets = [0, 32], sizes = [8, 8], strides = [1, 1]} : vector<8x96xbf16> to vector<8x8xbf16>
    %33 = vector.extract_strided_slice %30 {offsets = [0, 64], sizes = [8, 8], strides = [1, 1]} : vector<8x96xbf16> to vector<8x8xbf16>
    %cst_14 = arith.constant dense<0.000000e+00> : vector<8x8xf32>
    %34 = tpu.matmul %31, %32, %cst_14 {dimension_numbers = #tpu.dot_dimension_numbers<[1], [1], [0], [0], [0, 0, 1, 0], [], []>} : vector<8x8xbf16>, vector<8x8xbf16>, vector<8x8xf32> -> vector<8x8xf32>
    %cst_15 = arith.constant -1.000000e+30 : f32
    %35 = vector.broadcast %cst_15 : f32 to vector<8x8xf32>
    %36 = arith.select %11, %34, %35 : vector<8x8xi1>, vector<8x8xf32>
    %cst_16 = arith.constant dense<0xFF800000> : vector<8xf32>
    %37 = vector.multi_reduction <maximumf>, %36, %cst_16 [1] : vector<8x8xf32> to vector<8xf32>
    %38 = vector.shape_cast %37 : vector<8xf32> to vector<8x1xf32>
    %39 = vector.broadcast %38 : vector<8x1xf32> to vector<8x8xf32>
    %40 = arith.subf %36, %39 : vector<8x8xf32>
    %41 = math.exp %40 : vector<8x8xf32>
    %cst_17 = arith.constant dense<0.000000e+00> : vector<8xf32>
    %42 = vector.multi_reduction <add>, %41, %cst_17 [1] : vector<8x8xf32> to vector<8xf32>
    %43 = vector.shape_cast %42 : vector<8xf32> to vector<8x1xf32>
    %44 = tpu.reciprocal %43 {approx = true} : vector<8x1xf32> -> vector<8x1xf32>
    %45 = vector.broadcast %44 : vector<8x1xf32> to vector<8x8xf32>
    %46 = arith.mulf %41, %45 : vector<8x8xf32>
    %47 = arith.truncf %46 : vector<8x8xf32> to vector<8x8xbf16>
    %cst_18 = arith.constant dense<0.000000e+00> : vector<8x8xf32>
    %48 = tpu.matmul %47, %33, %cst_18 {dimension_numbers = #tpu.dot_dimension_numbers<[1], [0], [0], [1], [0, 0, 1, 1], [], []>} : vector<8x8xbf16>, vector<8x8xbf16>, vector<8x8xf32> -> vector<8x8xf32>
    %49 = vector.extract_strided_slice %30 {offsets = [0, 8], sizes = [8, 8], strides = [1, 1]} : vector<8x96xbf16> to vector<8x8xbf16>
    %50 = vector.extract_strided_slice %30 {offsets = [0, 40], sizes = [8, 8], strides = [1, 1]} : vector<8x96xbf16> to vector<8x8xbf16>
    %51 = vector.extract_strided_slice %30 {offsets = [0, 72], sizes = [8, 8], strides = [1, 1]} : vector<8x96xbf16> to vector<8x8xbf16>
    %cst_19 = arith.constant dense<0.000000e+00> : vector<8x8xf32>
    %52 = tpu.matmul %49, %50, %cst_19 {dimension_numbers = #tpu.dot_dimension_numbers<[1], [1], [0], [0], [0, 0, 1, 0], [], []>} : vector<8x8xbf16>, vector<8x8xbf16>, vector<8x8xf32> -> vector<8x8xf32>
    %cst_20 = arith.constant -1.000000e+30 : f32
    %53 = vector.broadcast %cst_20 : f32 to vector<8x8xf32>
    %54 = arith.select %11, %52, %53 : vector<8x8xi1>, vector<8x8xf32>
    %cst_21 = arith.constant dense<0xFF800000> : vector<8xf32>
    %55 = vector.multi_reduction <maximumf>, %54, %cst_21 [1] : vector<8x8xf32> to vector<8xf32>
    %56 = vector.shape_cast %55 : vector<8xf32> to vector<8x1xf32>
    %57 = vector.broadcast %56 : vector<8x1xf32> to vector<8x8xf32>
    %58 = arith.subf %54, %57 : vector<8x8xf32>
    %59 = math.exp %58 : vector<8x8xf32>
    %cst_22 = arith.constant dense<0.000000e+00> : vector<8xf32>
    %60 = vector.multi_reduction <add>, %59, %cst_22 [1] : vector<8x8xf32> to vector<8xf32>
    %61 = vector.shape_cast %60 : vector<8xf32> to vector<8x1xf32>
    %62 = tpu.reciprocal %61 {approx = true} : vector<8x1xf32> -> vector<8x1xf32>
    %63 = vector.broadcast %62 : vector<8x1xf32> to vector<8x8xf32>
    %64 = arith.mulf %59, %63 : vector<8x8xf32>
    %65 = arith.truncf %64 : vector<8x8xf32> to vector<8x8xbf16>
    %cst_23 = arith.constant dense<0.000000e+00> : vector<8x8xf32>
    %66 = tpu.matmul %65, %51, %cst_23 {dimension_numbers = #tpu.dot_dimension_numbers<[1], [0], [0], [1], [0, 0, 1, 1], [], []>} : vector<8x8xbf16>, vector<8x8xbf16>, vector<8x8xf32> -> vector<8x8xf32>
    %67 = vector.extract_strided_slice %30 {offsets = [0, 16], sizes = [8, 8], strides = [1, 1]} : vector<8x96xbf16> to vector<8x8xbf16>
    %68 = vector.extract_strided_slice %30 {offsets = [0, 48], sizes = [8, 8], strides = [1, 1]} : vector<8x96xbf16> to vector<8x8xbf16>
    %69 = vector.extract_strided_slice %30 {offsets = [0, 80], sizes = [8, 8], strides = [1, 1]} : vector<8x96xbf16> to vector<8x8xbf16>
    %cst_24 = arith.constant dense<0.000000e+00> : vector<8x8xf32>
    %70 = tpu.matmul %67, %68, %cst_24 {dimension_numbers = #tpu.dot_dimension_numbers<[1], [1], [0], [0], [0, 0, 1, 0], [], []>} : vector<8x8xbf16>, vector<8x8xbf16>, vector<8x8xf32> -> vector<8x8xf32>
    %cst_25 = arith.constant -1.000000e+30 : f32
    %71 = vector.broadcast %cst_25 : f32 to vector<8x8xf32>
    %72 = arith.select %11, %70, %71 : vector<8x8xi1>, vector<8x8xf32>
    %cst_26 = arith.constant dense<0xFF800000> : vector<8xf32>
    %73 = vector.multi_reduction <maximumf>, %72, %cst_26 [1] : vector<8x8xf32> to vector<8xf32>
    %74 = vector.shape_cast %73 : vector<8xf32> to vector<8x1xf32>
    %75 = vector.broadcast %74 : vector<8x1xf32> to vector<8x8xf32>
    %76 = arith.subf %72, %75 : vector<8x8xf32>
    %77 = math.exp %76 : vector<8x8xf32>
    %cst_27 = arith.constant dense<0.000000e+00> : vector<8xf32>
    %78 = vector.multi_reduction <add>, %77, %cst_27 [1] : vector<8x8xf32> to vector<8xf32>
    %79 = vector.shape_cast %78 : vector<8xf32> to vector<8x1xf32>
    %80 = tpu.reciprocal %79 {approx = true} : vector<8x1xf32> -> vector<8x1xf32>
    %81 = vector.broadcast %80 : vector<8x1xf32> to vector<8x8xf32>
    %82 = arith.mulf %77, %81 : vector<8x8xf32>
    %83 = arith.truncf %82 : vector<8x8xf32> to vector<8x8xbf16>
    %cst_28 = arith.constant dense<0.000000e+00> : vector<8x8xf32>
    %84 = tpu.matmul %83, %69, %cst_28 {dimension_numbers = #tpu.dot_dimension_numbers<[1], [0], [0], [1], [0, 0, 1, 1], [], []>} : vector<8x8xbf16>, vector<8x8xbf16>, vector<8x8xf32> -> vector<8x8xf32>
    %85 = vector.extract_strided_slice %30 {offsets = [0, 24], sizes = [8, 8], strides = [1, 1]} : vector<8x96xbf16> to vector<8x8xbf16>
    %86 = vector.extract_strided_slice %30 {offsets = [0, 56], sizes = [8, 8], strides = [1, 1]} : vector<8x96xbf16> to vector<8x8xbf16>
    %87 = vector.extract_strided_slice %30 {offsets = [0, 88], sizes = [8, 8], strides = [1, 1]} : vector<8x96xbf16> to vector<8x8xbf16>
    %cst_29 = arith.constant dense<0.000000e+00> : vector<8x8xf32>
    %88 = tpu.matmul %85, %86, %cst_29 {dimension_numbers = #tpu.dot_dimension_numbers<[1], [1], [0], [0], [0, 0, 1, 0], [], []>} : vector<8x8xbf16>, vector<8x8xbf16>, vector<8x8xf32> -> vector<8x8xf32>
    %cst_30 = arith.constant -1.000000e+30 : f32
    %89 = vector.broadcast %cst_30 : f32 to vector<8x8xf32>
    %90 = arith.select %11, %88, %89 : vector<8x8xi1>, vector<8x8xf32>
    %cst_31 = arith.constant dense<0xFF800000> : vector<8xf32>
    %91 = vector.multi_reduction <maximumf>, %90, %cst_31 [1] : vector<8x8xf32> to vector<8xf32>
    %92 = vector.shape_cast %91 : vector<8xf32> to vector<8x1xf32>
    %93 = vector.broadcast %92 : vector<8x1xf32> to vector<8x8xf32>
    %94 = arith.subf %90, %93 : vector<8x8xf32>
    %95 = math.exp %94 : vector<8x8xf32>
    %cst_32 = arith.constant dense<0.000000e+00> : vector<8xf32>
    %96 = vector.multi_reduction <add>, %95, %cst_32 [1] : vector<8x8xf32> to vector<8xf32>
    %97 = vector.shape_cast %96 : vector<8xf32> to vector<8x1xf32>
    %98 = tpu.reciprocal %97 {approx = true} : vector<8x1xf32> -> vector<8x1xf32>
    %99 = vector.broadcast %98 : vector<8x1xf32> to vector<8x8xf32>
    %100 = arith.mulf %95, %99 : vector<8x8xf32>
    %101 = arith.truncf %100 : vector<8x8xf32> to vector<8x8xbf16>
    %cst_33 = arith.constant dense<0.000000e+00> : vector<8x8xf32>
    %102 = tpu.matmul %101, %87, %cst_33 {dimension_numbers = #tpu.dot_dimension_numbers<[1], [0], [0], [1], [0, 0, 1, 1], [], []>} : vector<8x8xbf16>, vector<8x8xbf16>, vector<8x8xf32> -> vector<8x8xf32>
    %103 = tpu.concatenate %48, %66, %84, %102 in 1 : vector<8x8xf32>, vector<8x8xf32>, vector<8x8xf32>, vector<8x8xf32> -> vector<8x32xf32>
    %104 = arith.truncf %103 : vector<8x32xf32> to vector<8x32xbf16>
    %c0_34 = arith.constant 0 : index
    %c0_35 = arith.constant 0 : index
    %c0_36 = arith.constant 0 : index
    %105 = vector.load %arg5[%c0_34, %c0_35, %c0_36] : memref<2x32x32xbf16, #tpu.memory_space<vmem>>, vector<1x32x32xbf16>
    %106 = vector.shape_cast %105 : vector<1x32x32xbf16> to vector<32x32xbf16>
    %cst_37 = arith.constant dense<0.000000e+00> : vector<8x32xf32>
    %107 = tpu.matmul %104, %106, %cst_37 {dimension_numbers = #tpu.dot_dimension_numbers<[1], [0], [0], [1], [0, 0, 1, 1], [], []>} : vector<8x32xbf16>, vector<32x32xbf16>, vector<8x32xf32> -> vector<8x32xf32>
    %108 = arith.addf %8, %107 : vector<8x32xf32>
    %c0_38 = arith.constant 0 : index
    %c0_39 = arith.constant 0 : index
    %c0_40 = arith.constant 0 : index
    %109 = vector.load %arg6[%c0_38, %c0_39, %c0_40] : memref<2x1x32xf32, #tpu.memory_space<vmem>>, vector<1x1x32xf32>
    %110 = vector.shape_cast %109 : vector<1x1x32xf32> to vector<1x32xf32>
    %111 = arith.mulf %108, %108 : vector<8x32xf32>
    %cst_41 = arith.constant dense<0.000000e+00> : vector<8xf32>
    %112 = vector.multi_reduction <add>, %111, %cst_41 [1] : vector<8x32xf32> to vector<8xf32>
    %113 = vector.shape_cast %112 : vector<8xf32> to vector<8x1xf32>
    %cst_42 = arith.constant 3.200000e+01 : f32
    %114 = vector.broadcast %cst_42 : f32 to vector<8x1xf32>
    %115 = arith.divf %113, %114 : vector<8x1xf32>
    %cst_43 = arith.constant 9.99999997E-7 : f32
    %116 = vector.broadcast %cst_43 : f32 to vector<8x1xf32>
    %117 = arith.addf %115, %116 : vector<8x1xf32>
    %118 = math.rsqrt %117 : vector<8x1xf32>
    %119 = vector.broadcast %118 : vector<8x1xf32> to vector<8x32xf32>
    %120 = arith.mulf %108, %119 : vector<8x32xf32>
    %121 = vector.broadcast %110 : vector<1x32xf32> to vector<8x32xf32>
    %122 = arith.mulf %120, %121 : vector<8x32xf32>
    %123 = arith.truncf %122 : vector<8x32xf32> to vector<8x32xbf16>
    %c0_44 = arith.constant 0 : index
    %c0_45 = arith.constant 0 : index
    %c0_46 = arith.constant 0 : index
    %124 = vector.load %arg7[%c0_44, %c0_45, %c0_46] : memref<2x32x64xbf16, #tpu.memory_space<vmem>>, vector<1x32x64xbf16>
    %125 = vector.shape_cast %124 : vector<1x32x64xbf16> to vector<32x64xbf16>
    %cst_47 = arith.constant dense<0.000000e+00> : vector<8x64xf32>
    %126 = tpu.matmul %123, %125, %cst_47 {dimension_numbers = #tpu.dot_dimension_numbers<[1], [0], [0], [1], [0, 0, 1, 1], [], []>} : vector<8x32xbf16>, vector<32x64xbf16>, vector<8x64xf32> -> vector<8x64xf32>
    %127 = arith.mulf %126, %126 : vector<8x64xf32>
    %128 = arith.mulf %126, %127 : vector<8x64xf32>
    %cst_48 = arith.constant 4.471500e-02 : f32
    %129 = vector.broadcast %cst_48 : f32 to vector<8x64xf32>
    %130 = arith.mulf %129, %128 : vector<8x64xf32>
    %131 = arith.addf %126, %130 : vector<8x64xf32>
    %cst_49 = arith.constant 0.797884583 : f32
    %132 = vector.broadcast %cst_49 : f32 to vector<8x64xf32>
    %133 = arith.mulf %132, %131 : vector<8x64xf32>
    %134 = math.tanh %133 : vector<8x64xf32>
    %cst_50 = arith.constant 1.000000e+00 : f32
    %135 = vector.broadcast %cst_50 : f32 to vector<8x64xf32>
    %136 = arith.addf %135, %134 : vector<8x64xf32>
    %cst_51 = arith.constant 5.000000e-01 : f32
    %137 = vector.broadcast %cst_51 : f32 to vector<8x64xf32>
    %138 = arith.mulf %137, %136 : vector<8x64xf32>
    %139 = arith.mulf %126, %138 : vector<8x64xf32>
    %140 = arith.truncf %139 : vector<8x64xf32> to vector<8x64xbf16>
    %c0_52 = arith.constant 0 : index
    %c0_53 = arith.constant 0 : index
    %c0_54 = arith.constant 0 : index
    %141 = vector.load %arg8[%c0_52, %c0_53, %c0_54] : memref<2x64x32xbf16, #tpu.memory_space<vmem>>, vector<1x64x32xbf16>
    %142 = vector.shape_cast %141 : vector<1x64x32xbf16> to vector<64x32xbf16>
    %cst_55 = arith.constant dense<0.000000e+00> : vector<8x32xf32>
    %143 = tpu.matmul %140, %142, %cst_55 {dimension_numbers = #tpu.dot_dimension_numbers<[1], [0], [0], [1], [0, 0, 1, 1], [], []>} : vector<8x64xbf16>, vector<64x32xbf16>, vector<8x32xf32> -> vector<8x32xf32>
    %144 = arith.addf %108, %143 : vector<8x32xf32>
    %c1 = arith.constant 1 : index
    %c0_56 = arith.constant 0 : index
    %c0_57 = arith.constant 0 : index
    %145 = vector.load %arg3[%c1, %c0_56, %c0_57] : memref<2x1x32xf32, #tpu.memory_space<vmem>>, vector<1x1x32xf32>
    %146 = vector.shape_cast %145 : vector<1x1x32xf32> to vector<1x32xf32>
    %147 = arith.mulf %144, %144 : vector<8x32xf32>
    %cst_58 = arith.constant dense<0.000000e+00> : vector<8xf32>
    %148 = vector.multi_reduction <add>, %147, %cst_58 [1] : vector<8x32xf32> to vector<8xf32>
    %149 = vector.shape_cast %148 : vector<8xf32> to vector<8x1xf32>
    %cst_59 = arith.constant 3.200000e+01 : f32
    %150 = vector.broadcast %cst_59 : f32 to vector<8x1xf32>
    %151 = arith.divf %149, %150 : vector<8x1xf32>
    %cst_60 = arith.constant 9.99999997E-7 : f32
    %152 = vector.broadcast %cst_60 : f32 to vector<8x1xf32>
    %153 = arith.addf %151, %152 : vector<8x1xf32>
    %154 = math.rsqrt %153 : vector<8x1xf32>
    %155 = vector.broadcast %154 : vector<8x1xf32> to vector<8x32xf32>
    %156 = arith.mulf %144, %155 : vector<8x32xf32>
    %157 = vector.broadcast %146 : vector<1x32xf32> to vector<8x32xf32>
    %158 = arith.mulf %156, %157 : vector<8x32xf32>
    %159 = arith.truncf %158 : vector<8x32xf32> to vector<8x32xbf16>
    %c1_61 = arith.constant 1 : index
    %c0_62 = arith.constant 0 : index
    %c0_63 = arith.constant 0 : index
    %160 = vector.load %arg4[%c1_61, %c0_62, %c0_63] : memref<2x32x96xbf16, #tpu.memory_space<vmem>>, vector<1x32x96xbf16>
    %161 = vector.shape_cast %160 : vector<1x32x96xbf16> to vector<32x96xbf16>
    %cst_64 = arith.constant dense<0.000000e+00> : vector<8x96xf32>
    %162 = tpu.matmul %159, %161, %cst_64 {dimension_numbers = #tpu.dot_dimension_numbers<[1], [0], [0], [1], [0, 0, 1, 1], [], []>} : vector<8x32xbf16>, vector<32x96xbf16>, vector<8x96xf32> -> vector<8x96xf32>
    %163 = arith.truncf %162 : vector<8x96xf32> to vector<8x96xbf16>
    %164 = vector.extract_strided_slice %163 {offsets = [0, 0], sizes = [8, 8], strides = [1, 1]} : vector<8x96xbf16> to vector<8x8xbf16>
    %165 = vector.extract_strided_slice %163 {offsets = [0, 32], sizes = [8, 8], strides = [1, 1]} : vector<8x96xbf16> to vector<8x8xbf16>
    %166 = vector.extract_strided_slice %163 {offsets = [0, 64], sizes = [8, 8], strides = [1, 1]} : vector<8x96xbf16> to vector<8x8xbf16>
    %cst_65 = arith.constant dense<0.000000e+00> : vector<8x8xf32>
    %167 = tpu.matmul %164, %165, %cst_65 {dimension_numbers = #tpu.dot_dimension_numbers<[1], [1], [0], [0], [0, 0, 1, 0], [], []>} : vector<8x8xbf16>, vector<8x8xbf16>, vector<8x8xf32> -> vector<8x8xf32>
    %cst_66 = arith.constant -1.000000e+30 : f32
    %168 = vector.broadcast %cst_66 : f32 to vector<8x8xf32>
    %169 = arith.select %11, %167, %168 : vector<8x8xi1>, vector<8x8xf32>
    %cst_67 = arith.constant dense<0xFF800000> : vector<8xf32>
    %170 = vector.multi_reduction <maximumf>, %169, %cst_67 [1] : vector<8x8xf32> to vector<8xf32>
    %171 = vector.shape_cast %170 : vector<8xf32> to vector<8x1xf32>
    %172 = vector.broadcast %171 : vector<8x1xf32> to vector<8x8xf32>
    %173 = arith.subf %169, %172 : vector<8x8xf32>
    %174 = math.exp %173 : vector<8x8xf32>
    %cst_68 = arith.constant dense<0.000000e+00> : vector<8xf32>
    %175 = vector.multi_reduction <add>, %174, %cst_68 [1] : vector<8x8xf32> to vector<8xf32>
    %176 = vector.shape_cast %175 : vector<8xf32> to vector<8x1xf32>
    %177 = tpu.reciprocal %176 {approx = true} : vector<8x1xf32> -> vector<8x1xf32>
    %178 = vector.broadcast %177 : vector<8x1xf32> to vector<8x8xf32>
    %179 = arith.mulf %174, %178 : vector<8x8xf32>
    %180 = arith.truncf %179 : vector<8x8xf32> to vector<8x8xbf16>
    %cst_69 = arith.constant dense<0.000000e+00> : vector<8x8xf32>
    %181 = tpu.matmul %180, %166, %cst_69 {dimension_numbers = #tpu.dot_dimension_numbers<[1], [0], [0], [1], [0, 0, 1, 1], [], []>} : vector<8x8xbf16>, vector<8x8xbf16>, vector<8x8xf32> -> vector<8x8xf32>
    %182 = vector.extract_strided_slice %163 {offsets = [0, 8], sizes = [8, 8], strides = [1, 1]} : vector<8x96xbf16> to vector<8x8xbf16>
    %183 = vector.extract_strided_slice %163 {offsets = [0, 40], sizes = [8, 8], strides = [1, 1]} : vector<8x96xbf16> to vector<8x8xbf16>
    %184 = vector.extract_strided_slice %163 {offsets = [0, 72], sizes = [8, 8], strides = [1, 1]} : vector<8x96xbf16> to vector<8x8xbf16>
    %cst_70 = arith.constant dense<0.000000e+00> : vector<8x8xf32>
    %185 = tpu.matmul %182, %183, %cst_70 {dimension_numbers = #tpu.dot_dimension_numbers<[1], [1], [0], [0], [0, 0, 1, 0], [], []>} : vector<8x8xbf16>, vector<8x8xbf16>, vector<8x8xf32> -> vector<8x8xf32>
    %cst_71 = arith.constant -1.000000e+30 : f32
    %186 = vector.broadcast %cst_71 : f32 to vector<8x8xf32>
    %187 = arith.select %11, %185, %186 : vector<8x8xi1>, vector<8x8xf32>
    %cst_72 = arith.constant dense<0xFF800000> : vector<8xf32>
    %188 = vector.multi_reduction <maximumf>, %187, %cst_72 [1] : vector<8x8xf32> to vector<8xf32>
    %189 = vector.shape_cast %188 : vector<8xf32> to vector<8x1xf32>
    %190 = vector.broadcast %189 : vector<8x1xf32> to vector<8x8xf32>
    %191 = arith.subf %187, %190 : vector<8x8xf32>
    %192 = math.exp %191 : vector<8x8xf32>
    %cst_73 = arith.constant dense<0.000000e+00> : vector<8xf32>
    %193 = vector.multi_reduction <add>, %192, %cst_73 [1] : vector<8x8xf32> to vector<8xf32>
    %194 = vector.shape_cast %193 : vector<8xf32> to vector<8x1xf32>
    %195 = tpu.reciprocal %194 {approx = true} : vector<8x1xf32> -> vector<8x1xf32>
    %196 = vector.broadcast %195 : vector<8x1xf32> to vector<8x8xf32>
    %197 = arith.mulf %192, %196 : vector<8x8xf32>
    %198 = arith.truncf %197 : vector<8x8xf32> to vector<8x8xbf16>
    %cst_74 = arith.constant dense<0.000000e+00> : vector<8x8xf32>
    %199 = tpu.matmul %198, %184, %cst_74 {dimension_numbers = #tpu.dot_dimension_numbers<[1], [0], [0], [1], [0, 0, 1, 1], [], []>} : vector<8x8xbf16>, vector<8x8xbf16>, vector<8x8xf32> -> vector<8x8xf32>
    %200 = vector.extract_strided_slice %163 {offsets = [0, 16], sizes = [8, 8], strides = [1, 1]} : vector<8x96xbf16> to vector<8x8xbf16>
    %201 = vector.extract_strided_slice %163 {offsets = [0, 48], sizes = [8, 8], strides = [1, 1]} : vector<8x96xbf16> to vector<8x8xbf16>
    %202 = vector.extract_strided_slice %163 {offsets = [0, 80], sizes = [8, 8], strides = [1, 1]} : vector<8x96xbf16> to vector<8x8xbf16>
    %cst_75 = arith.constant dense<0.000000e+00> : vector<8x8xf32>
    %203 = tpu.matmul %200, %201, %cst_75 {dimension_numbers = #tpu.dot_dimension_numbers<[1], [1], [0], [0], [0, 0, 1, 0], [], []>} : vector<8x8xbf16>, vector<8x8xbf16>, vector<8x8xf32> -> vector<8x8xf32>
    %cst_76 = arith.constant -1.000000e+30 : f32
    %204 = vector.broadcast %cst_76 : f32 to vector<8x8xf32>
    %205 = arith.select %11, %203, %204 : vector<8x8xi1>, vector<8x8xf32>
    %cst_77 = arith.constant dense<0xFF800000> : vector<8xf32>
    %206 = vector.multi_reduction <maximumf>, %205, %cst_77 [1] : vector<8x8xf32> to vector<8xf32>
    %207 = vector.shape_cast %206 : vector<8xf32> to vector<8x1xf32>
    %208 = vector.broadcast %207 : vector<8x1xf32> to vector<8x8xf32>
    %209 = arith.subf %205, %208 : vector<8x8xf32>
    %210 = math.exp %209 : vector<8x8xf32>
    %cst_78 = arith.constant dense<0.000000e+00> : vector<8xf32>
    %211 = vector.multi_reduction <add>, %210, %cst_78 [1] : vector<8x8xf32> to vector<8xf32>
    %212 = vector.shape_cast %211 : vector<8xf32> to vector<8x1xf32>
    %213 = tpu.reciprocal %212 {approx = true} : vector<8x1xf32> -> vector<8x1xf32>
    %214 = vector.broadcast %213 : vector<8x1xf32> to vector<8x8xf32>
    %215 = arith.mulf %210, %214 : vector<8x8xf32>
    %216 = arith.truncf %215 : vector<8x8xf32> to vector<8x8xbf16>
    %cst_79 = arith.constant dense<0.000000e+00> : vector<8x8xf32>
    %217 = tpu.matmul %216, %202, %cst_79 {dimension_numbers = #tpu.dot_dimension_numbers<[1], [0], [0], [1], [0, 0, 1, 1], [], []>} : vector<8x8xbf16>, vector<8x8xbf16>, vector<8x8xf32> -> vector<8x8xf32>
    %218 = vector.extract_strided_slice %163 {offsets = [0, 24], sizes = [8, 8], strides = [1, 1]} : vector<8x96xbf16> to vector<8x8xbf16>
    %219 = vector.extract_strided_slice %163 {offsets = [0, 56], sizes = [8, 8], strides = [1, 1]} : vector<8x96xbf16> to vector<8x8xbf16>
    %220 = vector.extract_strided_slice %163 {offsets = [0, 88], sizes = [8, 8], strides = [1, 1]} : vector<8x96xbf16> to vector<8x8xbf16>
    %cst_80 = arith.constant dense<0.000000e+00> : vector<8x8xf32>
    %221 = tpu.matmul %218, %219, %cst_80 {dimension_numbers = #tpu.dot_dimension_numbers<[1], [1], [0], [0], [0, 0, 1, 0], [], []>} : vector<8x8xbf16>, vector<8x8xbf16>, vector<8x8xf32> -> vector<8x8xf32>
    %cst_81 = arith.constant -1.000000e+30 : f32
    %222 = vector.broadcast %cst_81 : f32 to vector<8x8xf32>
    %223 = arith.select %11, %221, %222 : vector<8x8xi1>, vector<8x8xf32>
    %cst_82 = arith.constant dense<0xFF800000> : vector<8xf32>
    %224 = vector.multi_reduction <maximumf>, %223, %cst_82 [1] : vector<8x8xf32> to vector<8xf32>
    %225 = vector.shape_cast %224 : vector<8xf32> to vector<8x1xf32>
    %226 = vector.broadcast %225 : vector<8x1xf32> to vector<8x8xf32>
    %227 = arith.subf %223, %226 : vector<8x8xf32>
    %228 = math.exp %227 : vector<8x8xf32>
    %cst_83 = arith.constant dense<0.000000e+00> : vector<8xf32>
    %229 = vector.multi_reduction <add>, %228, %cst_83 [1] : vector<8x8xf32> to vector<8xf32>
    %230 = vector.shape_cast %229 : vector<8xf32> to vector<8x1xf32>
    %231 = tpu.reciprocal %230 {approx = true} : vector<8x1xf32> -> vector<8x1xf32>
    %232 = vector.broadcast %231 : vector<8x1xf32> to vector<8x8xf32>
    %233 = arith.mulf %228, %232 : vector<8x8xf32>
    %234 = arith.truncf %233 : vector<8x8xf32> to vector<8x8xbf16>
    %cst_84 = arith.constant dense<0.000000e+00> : vector<8x8xf32>
    %235 = tpu.matmul %234, %220, %cst_84 {dimension_numbers = #tpu.dot_dimension_numbers<[1], [0], [0], [1], [0, 0, 1, 1], [], []>} : vector<8x8xbf16>, vector<8x8xbf16>, vector<8x8xf32> -> vector<8x8xf32>
    %236 = tpu.concatenate %181, %199, %217, %235 in 1 : vector<8x8xf32>, vector<8x8xf32>, vector<8x8xf32>, vector<8x8xf32> -> vector<8x32xf32>
    %237 = arith.truncf %236 : vector<8x32xf32> to vector<8x32xbf16>
    %c1_85 = arith.constant 1 : index
    %c0_86 = arith.constant 0 : index
    %c0_87 = arith.constant 0 : index
    %238 = vector.load %arg5[%c1_85, %c0_86, %c0_87] : memref<2x32x32xbf16, #tpu.memory_space<vmem>>, vector<1x32x32xbf16>
    %239 = vector.shape_cast %238 : vector<1x32x32xbf16> to vector<32x32xbf16>
    %cst_88 = arith.constant dense<0.000000e+00> : vector<8x32xf32>
    %240 = tpu.matmul %237, %239, %cst_88 {dimension_numbers = #tpu.dot_dimension_numbers<[1], [0], [0], [1], [0, 0, 1, 1], [], []>} : vector<8x32xbf16>, vector<32x32xbf16>, vector<8x32xf32> -> vector<8x32xf32>
    %241 = arith.addf %144, %240 : vector<8x32xf32>
    %c1_89 = arith.constant 1 : index
    %c0_90 = arith.constant 0 : index
    %c0_91 = arith.constant 0 : index
    %242 = vector.load %arg6[%c1_89, %c0_90, %c0_91] : memref<2x1x32xf32, #tpu.memory_space<vmem>>, vector<1x1x32xf32>
    %243 = vector.shape_cast %242 : vector<1x1x32xf32> to vector<1x32xf32>
    %244 = arith.mulf %241, %241 : vector<8x32xf32>
    %cst_92 = arith.constant dense<0.000000e+00> : vector<8xf32>
    %245 = vector.multi_reduction <add>, %244, %cst_92 [1] : vector<8x32xf32> to vector<8xf32>
    %246 = vector.shape_cast %245 : vector<8xf32> to vector<8x1xf32>
    %cst_93 = arith.constant 3.200000e+01 : f32
    %247 = vector.broadcast %cst_93 : f32 to vector<8x1xf32>
    %248 = arith.divf %246, %247 : vector<8x1xf32>
    %cst_94 = arith.constant 9.99999997E-7 : f32
    %249 = vector.broadcast %cst_94 : f32 to vector<8x1xf32>
    %250 = arith.addf %248, %249 : vector<8x1xf32>
    %251 = math.rsqrt %250 : vector<8x1xf32>
    %252 = vector.broadcast %251 : vector<8x1xf32> to vector<8x32xf32>
    %253 = arith.mulf %241, %252 : vector<8x32xf32>
    %254 = vector.broadcast %243 : vector<1x32xf32> to vector<8x32xf32>
    %255 = arith.mulf %253, %254 : vector<8x32xf32>
    %256 = arith.truncf %255 : vector<8x32xf32> to vector<8x32xbf16>
    %c1_95 = arith.constant 1 : index
    %c0_96 = arith.constant 0 : index
    %c0_97 = arith.constant 0 : index
    %257 = vector.load %arg7[%c1_95, %c0_96, %c0_97] : memref<2x32x64xbf16, #tpu.memory_space<vmem>>, vector<1x32x64xbf16>
    %258 = vector.shape_cast %257 : vector<1x32x64xbf16> to vector<32x64xbf16>
    %cst_98 = arith.constant dense<0.000000e+00> : vector<8x64xf32>
    %259 = tpu.matmul %256, %258, %cst_98 {dimension_numbers = #tpu.dot_dimension_numbers<[1], [0], [0], [1], [0, 0, 1, 1], [], []>} : vector<8x32xbf16>, vector<32x64xbf16>, vector<8x64xf32> -> vector<8x64xf32>
    %260 = arith.mulf %259, %259 : vector<8x64xf32>
    %261 = arith.mulf %259, %260 : vector<8x64xf32>
    %cst_99 = arith.constant 4.471500e-02 : f32
    %262 = vector.broadcast %cst_99 : f32 to vector<8x64xf32>
    %263 = arith.mulf %262, %261 : vector<8x64xf32>
    %264 = arith.addf %259, %263 : vector<8x64xf32>
    %cst_100 = arith.constant 0.797884583 : f32
    %265 = vector.broadcast %cst_100 : f32 to vector<8x64xf32>
    %266 = arith.mulf %265, %264 : vector<8x64xf32>
    %267 = math.tanh %266 : vector<8x64xf32>
    %cst_101 = arith.constant 1.000000e+00 : f32
    %268 = vector.broadcast %cst_101 : f32 to vector<8x64xf32>
    %269 = arith.addf %268, %267 : vector<8x64xf32>
    %cst_102 = arith.constant 5.000000e-01 : f32
    %270 = vector.broadcast %cst_102 : f32 to vector<8x64xf32>
    %271 = arith.mulf %270, %269 : vector<8x64xf32>
    %272 = arith.mulf %259, %271 : vector<8x64xf32>
    %273 = arith.truncf %272 : vector<8x64xf32> to vector<8x64xbf16>
    %c1_103 = arith.constant 1 : index
    %c0_104 = arith.constant 0 : index
    %c0_105 = arith.constant 0 : index
    %274 = vector.load %arg8[%c1_103, %c0_104, %c0_105] : memref<2x64x32xbf16, #tpu.memory_space<vmem>>, vector<1x64x32xbf16>
    %275 = vector.shape_cast %274 : vector<1x64x32xbf16> to vector<64x32xbf16>
    %cst_106 = arith.constant dense<0.000000e+00> : vector<8x32xf32>
    %276 = tpu.matmul %273, %275, %cst_106 {dimension_numbers = #tpu.dot_dimension_numbers<[1], [0], [0], [1], [0, 0, 1, 1], [], []>} : vector<8x64xbf16>, vector<64x32xbf16>, vector<8x32xf32> -> vector<8x32xf32>
    %277 = arith.addf %241, %276 : vector<8x32xf32>
    %c0_107 = arith.constant 0 : index
    %c0_108 = arith.constant 0 : index
    %278 = vector.load %arg9[%c0_107, %c0_108] : memref<1x32xf32, #tpu.memory_space<vmem>>, vector<1x32xf32>
    %279 = arith.mulf %277, %277 : vector<8x32xf32>
    %cst_109 = arith.constant dense<0.000000e+00> : vector<8xf32>
    %280 = vector.multi_reduction <add>, %279, %cst_109 [1] : vector<8x32xf32> to vector<8xf32>
    %281 = vector.shape_cast %280 : vector<8xf32> to vector<8x1xf32>
    %cst_110 = arith.constant 3.200000e+01 : f32
    %282 = vector.broadcast %cst_110 : f32 to vector<8x1xf32>
    %283 = arith.divf %281, %282 : vector<8x1xf32>
    %cst_111 = arith.constant 9.99999997E-7 : f32
    %284 = vector.broadcast %cst_111 : f32 to vector<8x1xf32>
    %285 = arith.addf %283, %284 : vector<8x1xf32>
    %286 = math.rsqrt %285 : vector<8x1xf32>
    %287 = vector.broadcast %286 : vector<8x1xf32> to vector<8x32xf32>
    %288 = arith.mulf %277, %287 : vector<8x32xf32>
    %289 = vector.broadcast %278 : vector<1x32xf32> to vector<8x32xf32>
    %290 = arith.mulf %288, %289 : vector<8x32xf32>
    %291 = arith.truncf %290 : vector<8x32xf32> to vector<8x32xbf16>
    %c0_112 = arith.constant 0 : index
    %c0_113 = arith.constant 0 : index
    %292 = vector.load %arg10[%c0_112, %c0_113] : memref<32x128xbf16, #tpu.memory_space<vmem>>, vector<32x128xbf16>
    %cst_114 = arith.constant dense<0.000000e+00> : vector<8x128xf32>
    %293 = tpu.matmul %291, %292, %cst_114 {dimension_numbers = #tpu.dot_dimension_numbers<[1], [0], [0], [1], [0, 0, 1, 1], [], []>} : vector<8x32xbf16>, vector<32x128xbf16>, vector<8x128xf32> -> vector<8x128xf32>
    %c0_115 = arith.constant 0 : index
    %c0_116 = arith.constant 0 : index
    %c0_117 = arith.constant 0 : index
    %294 = vector.load %arg11[%c0_115, %c0_116, %c0_117] : memref<1x8x128xf32, #tpu.memory_space<vmem>>, vector<1x8x128xf32>
    %295 = vector.shape_cast %294 : vector<1x8x128xf32> to vector<8x128xf32>
    %296 = vector.shape_cast %293 : vector<8x128xf32> to vector<1x8x128xf32>
    tpu.vector_store %arg11[%c0_115, %c0_116, %c0_117], %296 {strides = array<i32>} : memref<1x8x128xf32, #tpu.memory_space<vmem>>, vector<1x8x128xf32>,
    return
  }
  func.func @transform_0(%arg0: i32) -> (i32, i32, i32) {
    %c0_i32 = arith.constant 0 : i32
    %c0_i32_0 = arith.constant 0 : i32
    %c0_i32_1 = arith.constant 0 : i32
    return %arg0, %c0_i32, %c0_i32_0 : i32, i32, i32
  }
  func.func @transform_1(%arg0: i32) -> (i32, i32) {
    %c0_i32 = arith.constant 0 : i32
    %c0_i32_0 = arith.constant 0 : i32
    %c0_i32_1 = arith.constant 0 : i32
    return %c0_i32, %c0_i32_0 : i32, i32
  }
  func.func @transform_2(%arg0: i32) -> (i32, i32, i32) {
    %c0_i32 = arith.constant 0 : i32
    %c0_i32_0 = arith.constant 0 : i32
    %c0_i32_1 = arith.constant 0 : i32
    %c0_i32_2 = arith.constant 0 : i32
    return %c0_i32, %c0_i32_0, %c0_i32_1 : i32, i32, i32
  }
  func.func @transform_3(%arg0: i32) -> (i32, i32, i32) {
    %c0_i32 = arith.constant 0 : i32
    %c0_i32_0 = arith.constant 0 : i32
    %c0_i32_1 = arith.constant 0 : i32
    %c0_i32_2 = arith.constant 0 : i32
    return %c0_i32, %c0_i32_0, %c0_i32_1 : i32, i32, i32
  }
  func.func @transform_4(%arg0: i32) -> (i32, i32, i32) {
    %c0_i32 = arith.constant 0 : i32
    %c0_i32_0 = arith.constant 0 : i32
    %c0_i32_1 = arith.constant 0 : i32
    %c0_i32_2 = arith.constant 0 : i32
    return %c0_i32, %c0_i32_0, %c0_i32_1 : i32, i32, i32
  }
  func.func @transform_5(%arg0: i32) -> (i32, i32, i32) {
    %c0_i32 = arith.constant 0 : i32
    %c0_i32_0 = arith.constant 0 : i32
    %c0_i32_1 = arith.constant 0 : i32
    %c0_i32_2 = arith.constant 0 : i32
    return %c0_i32, %c0_i32_0, %c0_i32_1 : i32, i32, i32
  }
  func.func @transform_6(%arg0: i32) -> (i32, i32, i32) {
    %c0_i32 = arith.constant 0 : i32
    %c0_i32_0 = arith.constant 0 : i32
    %c0_i32_1 = arith.constant 0 : i32
    %c0_i32_2 = arith.constant 0 : i32
    return %c0_i32, %c0_i32_0, %c0_i32_1 : i32, i32, i32
  }
  func.func @transform_7(%arg0: i32) -> (i32, i32, i32) {
    %c0_i32 = arith.constant 0 : i32
    %c0_i32_0 = arith.constant 0 : i32
    %c0_i32_1 = arith.constant 0 : i32
    %c0_i32_2 = arith.constant 0 : i32
    return %c0_i32, %c0_i32_0, %c0_i32_1 : i32, i32, i32
  }
  func.func @transform_8(%arg0: i32) -> (i32, i32) {
    %c0_i32 = arith.constant 0 : i32
    %c0_i32_0 = arith.constant 0 : i32
    %c0_i32_1 = arith.constant 0 : i32
    return %c0_i32, %c0_i32_0 : i32, i32
  }
  func.func @transform_9(%arg0: i32) -> (i32, i32) {
    %c0_i32 = arith.constant 0 : i32
    %c0_i32_0 = arith.constant 0 : i32
    %c0_i32_1 = arith.constant 0 : i32
    return %c0_i32, %c0_i32_0 : i32, i32
  }
  func.func @transform_10(%arg0: i32) -> (i32, i32, i32) {
    %c0_i32 = arith.constant 0 : i32
    %c0_i32_0 = arith.constant 0 : i32
    %c0_i32_1 = arith.constant 0 : i32
    return %arg0, %c0_i32, %c0_i32_0 : i32, i32, i32
  }
}

</mosaic_0001>

<llo_original>
// kernel: peft_causal_lm_forward.1
$region0: #{peft_causal_lm_forward.1}
  #allocation0 [shape = 'u32[]', space=smem, size = 0x4, offset = 0x4, fixed_abs, tag = 'smem constant byte address 0x4 - core index']
  #allocation1 [shape = 'u32[144,128]{1,0:T(1,128)}', space=vmem, size = 0x12000, scoped, tag = 'internal scratch']
  %s0 = inlined_call_operand.vmem [shape: s32[2,8,1], index: 0, kind: input, shape index: {}]
  %s1 = inlined_call_operand.vmem [shape: f32[128,32], index: 1, kind: input, shape index: {}]
  %s2 = inlined_call_operand.vmem [shape: f32[2,1,32], index: 2, kind: input, shape index: {}]
  %s3 = inlined_call_operand.vmem [shape: bf16[2,32,96], index: 3, kind: input, shape index: {}]
  %s4 = inlined_call_operand.vmem [shape: bf16[2,32,32], index: 4, kind: input, shape index: {}]
  %s5 = inlined_call_operand.vmem [shape: f32[2,1,32], index: 5, kind: input, shape index: {}]
  %s6 = inlined_call_operand.vmem [shape: bf16[2,32,64], index: 6, kind: input, shape index: {}]
  %s7 = inlined_call_operand.vmem [shape: bf16[2,64,32], index: 7, kind: input, shape index: {}]
  %s8 = inlined_call_operand.vmem [shape: f32[1,32], index: 8, kind: input, shape index: {}]
  %s9 = inlined_call_operand.vmem [shape: bf16[32,128], index: 9, kind: input, shape index: {}]
  %s10 = inlined_call_operand.hbm [shape: f32[2,8,128], index: 10, kind: output, shape index: {}]
  %s11 = sld [smem:[#allocation0]]
  $region73: #{peft_causal_lm_forward.1} parent=0
    _
  %s13 = ssub.s32 1, %s11
  %s14 = scalar_select 0, %s13, %s11
  $region1: #{peft_causal_lm_forward.1} parent=0
    #allocation2 [shape = 'u8[8192]{0}', space=vmem, size = 0x2000, scoped, tag = 'output window, operand 0']
    #allocation3 [shape = 's32[2]{0}', space=sflag, size = 0x8, scoped, tag = 'scoped memory for peft_causal_lm_forward.1']
    %15 = vsyncpa [#allocation3], 0
    %s16 = scalar_lea.sflag [#allocation3], 1
    %17 = vsyncpa %s16, 0
    loop: start=0, step=1, limit=4
    $region2: #{peft_causal_lm_forward.1} parent=1 // loop_pre_header
      _
    $region3: #{peft_causal_lm_forward.1} parent=1 // loop_header
      %s19 = sphi 0, %s23
      %p20 = scmp.ge.s32.totalorder %s19, 4
      %s29 = sphi 0, %s31
      %s32 = sphi 0, %s29
      %s33 = sphi 0, %s32
      %s49 = sphi 0, %s33
      %s53 = sphi 0, %s53
      %s55 = sphi 0, %s53
      %s56 = sphi 0, %s55
      %s70 = sphi 0, %s56
      %s74 = sphi 0, %s74
      %s76 = sphi 0, %s74
      %s77 = sphi 0, %s76
      %s91 = sphi 0, %s77
      %s95 = sphi 0, %s95
      %s97 = sphi 0, %s95
      %s98 = sphi 0, %s97
      %s112 = sphi 0, %s98
      %s116 = sphi 0, %s116
      %s118 = sphi 0, %s116
      %s119 = sphi 0, %s118
      %s133 = sphi 0, %s119
      %s137 = sphi 0, %s137
      %s139 = sphi 0, %s137
      %s140 = sphi 0, %s139
      %s154 = sphi 0, %s140
      %s158 = sphi 0, %s158
      %s160 = sphi 0, %s158
      %s161 = sphi 0, %s160
      %s175 = sphi 0, %s161
      %s179 = sphi 0, %s179
      %s181 = sphi 0, %s179
      %s182 = sphi 0, %s181
      %s196 = sphi 0, %s182
      %s200 = sphi 0, %s200
      %s202 = sphi 0, %s200
      %s203 = sphi 0, %s202
      %s217 = sphi 0, %s203
      %s221 = sphi 0, %s221
      %s223 = sphi 0, %s221
      %s224 = sphi 0, %s223
      %s238 = sphi 0, %s224
      %s244 = sphi 0, %s246
      %s247 = sphi 0, %s244
      %s248 = sphi 0, %s247
      %s264 = sphi 0, %s248
    $region4: #{peft_causal_lm_forward.1} parent=1 // loop_header_branch
      %22 = sbr.rel (%p20) target = $region8
    $region5: #{peft_causal_lm_forward.1} parent=1 // loop_body
      %s24 = ssub.s32 %s19, 1
      %s25 = ssub.s32 %s19, 2
      %s26 = sadd.s32 %s19, 1
      %s27 = ssub.s32 %s19, %s26
      %p28 = scmp.eq.s32.totalorder %s27, 0
      %s30 = sadd.s32 %s29, 1
      %s31 = scalar_select %p28, %s29, %s30
      %p34 = pneg %p28
      %p35 = scmp.eq.s32.totalorder %s19, 1
      %p36 = por %p34, %p35
      %p37 = scmp.ne.s32.totalorder %s29, %s32
      %p38 = scmp.eq.s32.totalorder %s19, 0
      %p39 = por %p37, %p38
      %p40 = scmp.ne.s32.totalorder %s29, %s32
      %p41 = scmp.eq.s32.totalorder %s24, 1
      %p42 = por %p40, %p41
      %p43 = scmp.ne.s32.totalorder %s32, %s33
      %p44 = scmp.eq.s32.totalorder %s24, 0
      %p45 = por %p43, %p44
      %p46 = scmp.ne.s32.totalorder %s32, %s33
      %p47 = scmp.eq.s32.totalorder %s25, 1
      %p48 = por %p46, %p47
      %p50 = scmp.ne.s32.totalorder %s33, %s49
      %p51 = scmp.eq.s32.totalorder %s25, 0
      %p52 = por %p50, %p51
      %s54 = sadd.s32 %s53, 1
      %p57 = scmp.eq.s32.totalorder %s19, 1
      %p58 = scmp.ne.s32.totalorder %s53, %s55
      %p59 = scmp.eq.s32.totalorder %s19, 0
      %p60 = por %p58, %p59
      %p61 = scmp.ne.s32.totalorder %s53, %s55
      %p62 = scmp.eq.s32.totalorder %s24, 1
      %p63 = por %p61, %p62
      %p64 = scmp.ne.s32.totalorder %s55, %s56
      %p65 = scmp.eq.s32.totalorder %s24, 0
      %p66 = por %p64, %p65
      %p67 = scmp.ne.s32.totalorder %s55, %s56
      %p68 = scmp.eq.s32.totalorder %s25, 1
      %p69 = por %p67, %p68
      %p71 = scmp.ne.s32.totalorder %s56, %s70
      %p72 = scmp.eq.s32.totalorder %s25, 0
      %p73 = por %p71, %p72
      %s75 = sadd.s32 %s74, 1
      %p78 = scmp.eq.s32.totalorder %s19, 1
      %p79 = scmp.ne.s32.totalorder %s74, %s76
      %p80 = scmp.eq.s32.totalorder %s19, 0
      %p81 = por %p79, %p80
      %p82 = scmp.ne.s32.totalorder %s74, %s76
      %p83 = scmp.eq.s32.totalorder %s24, 1
      %p84 = por %p82, %p83
      %p85 = scmp.ne.s32.totalorder %s76, %s77
      %p86 = scmp.eq.s32.totalorder %s24, 0
      %p87 = por %p85, %p86
      %p88 = scmp.ne.s32.totalorder %s76, %s77
      %p89 = scmp.eq.s32.totalorder %s25, 1
      %p90 = por %p88, %p89
      %p92 = scmp.ne.s32.totalorder %s77, %s91
      %p93 = scmp.eq.s32.totalorder %s25, 0
      %p94 = por %p92, %p93
      %s96 = sadd.s32 %s95, 1
      %p99 = scmp.eq.s32.totalorder %s19, 1
      %p100 = scmp.ne.s32.totalorder %s95, %s97
      %p101 = scmp.eq.s32.totalorder %s19, 0
      %p102 = por %p100, %p101
      %p103 = scmp.ne.s32.totalorder %s95, %s97
      %p104 = scmp.eq.s32.totalorder %s24, 1
      %p105 = por %p103, %p104
      %p106 = scmp.ne.s32.totalorder %s97, %s98
      %p107 = scmp.eq.s32.totalorder %s24, 0
      %p108 = por %p106, %p107
      %p109 = scmp.ne.s32.totalorder %s97, %s98
      %p110 = scmp.eq.s32.totalorder %s25, 1
      %p111 = por %p109, %p110
      %p113 = scmp.ne.s32.totalorder %s98, %s112
      %p114 = scmp.eq.s32.totalorder %s25, 0
      %p115 = por %p113, %p114
      %s117 = sadd.s32 %s116, 1
      %p120 = scmp.eq.s32.totalorder %s19, 1
      %p121 = scmp.ne.s32.totalorder %s116, %s118
      %p122 = scmp.eq.s32.totalorder %s19, 0
      %p123 = por %p121, %p122
      %p124 = scmp.ne.s32.totalorder %s116, %s118
      %p125 = scmp.eq.s32.totalorder %s24, 1
      %p126 = por %p124, %p125
      %p127 = scmp.ne.s32.totalorder %s118, %s119
      %p128 = scmp.eq.s32.totalorder %s24, 0
      %p129 = por %p127, %p128
      %p130 = scmp.ne.s32.totalorder %s118, %s119
      %p131 = scmp.eq.s32.totalorder %s25, 1
      %p132 = por %p130, %p131
      %p134 = scmp.ne.s32.totalorder %s119, %s133
      %p135 = scmp.eq.s32.totalorder %s25, 0
      %p136 = por %p134, %p135
      %s138 = sadd.s32 %s137, 1
      %p141 = scmp.eq.s32.totalorder %s19, 1
      %p142 = scmp.ne.s32.totalorder %s137, %s139
      %p143 = scmp.eq.s32.totalorder %s19, 0
      %p144 = por %p142, %p143
      %p145 = scmp.ne.s32.totalorder %s137, %s139
      %p146 = scmp.eq.s32.totalorder %s24, 1
      %p147 = por %p145, %p146
      %p148 = scmp.ne.s32.totalorder %s139, %s140
      %p149 = scmp.eq.s32.totalorder %s24, 0
      %p150 = por %p148, %p149
      %p151 = scmp.ne.s32.totalorder %s139, %s140
      %p152 = scmp.eq.s32.totalorder %s25, 1
      %p153 = por %p151, %p152
      %p155 = scmp.ne.s32.totalorder %s140, %s154
      %p156 = scmp.eq.s32.totalorder %s25, 0
      %p157 = por %p155, %p156
      %s159 = sadd.s32 %s158, 1
      %p162 = scmp.eq.s32.totalorder %s19, 1
      %p163 = scmp.ne.s32.totalorder %s158, %s160
      %p164 = scmp.eq.s32.totalorder %s19, 0
      %p165 = por %p163, %p164
      %p166 = scmp.ne.s32.totalorder %s158, %s160
      %p167 = scmp.eq.s32.totalorder %s24, 1
      %p168 = por %p166, %p167
      %p169 = scmp.ne.s32.totalorder %s160, %s161
      %p170 = scmp.eq.s32.totalorder %s24, 0
      %p171 = por %p169, %p170
      %p172 = scmp.ne.s32.totalorder %s160, %s161
      %p173 = scmp.eq.s32.totalorder %s25, 1
      %p174 = por %p172, %p173
      %p176 = scmp.ne.s32.totalorder %s161, %s175
      %p177 = scmp.eq.s32.totalorder %s25, 0
      %p178 = por %p176, %p177
      %s180 = sadd.s32 %s179, 1
      %p183 = scmp.eq.s32.totalorder %s19, 1
      %p184 = scmp.ne.s32.totalorder %s179, %s181
      %p185 = scmp.eq.s32.totalorder %s19, 0
      %p186 = por %p184, %p185
      %p187 = scmp.ne.s32.totalorder %s179, %s181
      %p188 = scmp.eq.s32.totalorder %s24, 1
      %p189 = por %p187, %p188
      %p190 = scmp.ne.s32.totalorder %s181, %s182
      %p191 = scmp.eq.s32.totalorder %s24, 0
      %p192 = por %p190, %p191
      %p193 = scmp.ne.s32.totalorder %s181, %s182
      %p194 = scmp.eq.s32.totalorder %s25, 1
      %p195 = por %p193, %p194
      %p197 = scmp.ne.s32.totalorder %s182, %s196
      %p198 = scmp.eq.s32.totalorder %s25, 0
      %p199 = por %p197, %p198
      %s201 = sadd.s32 %s200, 1
      %p204 = scmp.eq.s32.totalorder %s19, 1
      %p205 = scmp.ne.s32.totalorder %s200, %s202
      %p206 = scmp.eq.s32.totalorder %s19, 0
      %p207 = por %p205, %p206
      %p208 = scmp.ne.s32.totalorder %s200, %s202
      %p209 = scmp.eq.s32.totalorder %s24, 1
      %p210 = por %p208, %p209
      %p211 = scmp.ne.s32.totalorder %s202, %s203
      %p212 = scmp.eq.s32.totalorder %s24, 0
      %p213 = por %p211, %p212
      %p214 = scmp.ne.s32.totalorder %s202, %s203
      %p215 = scmp.eq.s32.totalorder %s25, 1
      %p216 = por %p214, %p215
      %p218 = scmp.ne.s32.totalorder %s203, %s217
      %p219 = scmp.eq.s32.totalorder %s25, 0
      %p220 = por %p218, %p219
      %s222 = sadd.s32 %s221, 1
      %p225 = scmp.eq.s32.totalorder %s19, 1
      %p226 = scmp.ne.s32.totalorder %s221, %s223
      %p227 = scmp.eq.s32.totalorder %s19, 0
      %p228 = por %p226, %p227
      %p229 = scmp.ne.s32.totalorder %s221, %s223
      %p230 = scmp.eq.s32.totalorder %s24, 1
      %p231 = por %p229, %p230
      %p232 = scmp.ne.s32.totalorder %s223, %s224
      %p233 = scmp.eq.s32.totalorder %s24, 0
      %p234 = por %p232, %p233
      %p235 = scmp.ne.s32.totalorder %s223, %s224
      %p236 = scmp.eq.s32.totalorder %s25, 1
      %p237 = por %p235, %p236
      %p239 = scmp.ne.s32.totalorder %s224, %s238
      %p240 = scmp.eq.s32.totalorder %s25, 0
      %p241 = por %p239, %p240
      %s242 = ssub.s32 %s19, %s26
      %p243 = scmp.eq.s32.totalorder %s242, 0
      %s245 = sadd.s32 %s244, 1
      %s246 = scalar_select %p243, %s244, %s245
      %p249 = pneg %p243
      %p250 = scmp.eq.s32.totalorder %s19, 1
      %p251 = por %p249, %p250
      %p252 = scmp.ne.s32.totalorder %s244, %s247
      %p253 = scmp.eq.s32.totalorder %s19, 0
      %p254 = por %p252, %p253
      %p255 = scmp.ne.s32.totalorder %s244, %s247
      %p256 = scmp.eq.s32.totalorder %s24, 1
      %p257 = por %p255, %p256
      %p258 = scmp.ne.s32.totalorder %s247, %s248
      %p259 = scmp.eq.s32.totalorder %s24, 0
      %p260 = por %p258, %p259
      %p261 = scmp.ne.s32.totalorder %s247, %s248
      %p262 = scmp.eq.s32.totalorder %s25, 1
      %p263 = por %p261, %p262
      %p265 = scmp.ne.s32.totalorder %s248, %s264
      %p266 = scmp.eq.s32.totalorder %s25, 0
      %p267 = por %p265, %p266
      %p268 = scmp.le.s32.totalorder 1, %s19
      %p269 = scmp.lt.s32.totalorder %s19, 3
      %p270 = pnand %p268, %p269
      %p271 = pneg %p270
      // Predicated region
      $region9: #{peft_causal_lm_forward.1} parent=5 // pred_check
        _
      $region10: #{peft_causal_lm_forward.1} parent=5 // pred_check_branch
        %273 = sbr.rel (%p270) target = $region12
      $region11: #{peft_causal_lm_forward.1} parent=5 // pred_region
        %s274 = ssub.s32 %s19, 1
        // Predicated region
        $region13: #{peft_causal_lm_forward.1} parent=11 // pred_check
          %p275 = pneg %p66
        $region14: #{peft_causal_lm_forward.1} parent=11 // pred_check_branch
          %277 = sbr.rel (%p275) target = $region16
        $region15: #{peft_causal_lm_forward.1} parent=11 // pred_region
          _
        $region16: #{peft_causal_lm_forward.1} parent=11 // pred_fallthru
          _
        // Predicated region
        $region17: #{peft_causal_lm_forward.1} parent=11 // pred_check
          %p278 = pneg %p87
        $region18: #{peft_causal_lm_forward.1} parent=11 // pred_check_branch
          %280 = sbr.rel (%p278) target = $region20
        $region19: #{peft_causal_lm_forward.1} parent=11 // pred_region
          _
        $region20: #{peft_causal_lm_forward.1} parent=11 // pred_fallthru
          _
        // Predicated region
        $region21: #{peft_causal_lm_forward.1} parent=11 // pred_check
          %p281 = pneg %p108
        $region22: #{peft_causal_lm_forward.1} parent=11 // pred_check_branch
          %283 = sbr.rel (%p281) target = $region24
        $region23: #{peft_causal_lm_forward.1} parent=11 // pred_region
          _
        $region24: #{peft_causal_lm_forward.1} parent=11 // pred_fallthru
          _
        // Predicated region
        $region25: #{peft_causal_lm_forward.1} parent=11 // pred_check
          %p284 = pneg %p129
        $region26: #{peft_causal_lm_forward.1} parent=11 // pred_check_branch
          %286 = sbr.rel (%p284) target = $region28
        $region27: #{peft_causal_lm_forward.1} parent=11 // pred_region
          _
        $region28: #{peft_causal_lm_forward.1} parent=11 // pred_fallthru
          _
        // Predicated region
        $region29: #{peft_causal_lm_forward.1} parent=11 // pred_check
          %p287 = pneg %p150
        $region30: #{peft_causal_lm_forward.1} parent=11 // pred_check_branch
          %289 = sbr.rel (%p287) target = $region32
        $region31: #{peft_causal_lm_forward.1} parent=11 // pred_region
          _
        $region32: #{peft_causal_lm_forward.1} parent=11 // pred_fallthru
          _
        // Predicated region
        $region33: #{peft_causal_lm_forward.1} parent=11 // pred_check
          %p290 = pneg %p171
        $region34: #{peft_causal_lm_forward.1} parent=11 // pred_check_branch
          %292 = sbr.rel (%p290) target = $region36
        $region35: #{peft_causal_lm_forward.1} parent=11 // pred_region
          _
        $region36: #{peft_causal_lm_forward.1} parent=11 // pred_fallthru
          _
        // Predicated region
        $region37: #{peft_causal_lm_forward.1} parent=11 // pred_check
          %p293 = pneg %p192
        $region38: #{peft_causal_lm_forward.1} parent=11 // pred_check_branch
          %295 = sbr.rel (%p293) target = $region40
        $region39: #{peft_causal_lm_forward.1} parent=11 // pred_region
          _
        $region40: #{peft_causal_lm_forward.1} parent=11 // pred_fallthru
          _
        // Predicated region
        $region41: #{peft_causal_lm_forward.1} parent=11 // pred_check
          %p296 = pneg %p213
        $region42: #{peft_causal_lm_forward.1} parent=11 // pred_check_branch
          %298 = sbr.rel (%p296) target = $region44
        $region43: #{peft_causal_lm_forward.1} parent=11 // pred_region
          _
        $region44: #{peft_causal_lm_forward.1} parent=11 // pred_fallthru
          _
        // Predicated region
        $region45: #{peft_causal_lm_forward.1} parent=11 // pred_check
          %p299 = pneg %p234
        $region46: #{peft_causal_lm_forward.1} parent=11 // pred_check_branch
          %301 = sbr.rel (%p299) target = $region48
        $region47: #{peft_causal_lm_forward.1} parent=11 // pred_region
          _
        $region48: #{peft_causal_lm_forward.1} parent=11 // pred_fallthru
          _
      $region12: #{peft_causal_lm_forward.1} parent=5 // pred_fallthru
        _
      %p302 = scmp.lt.s32.totalorder %s19, 2
      // Predicated region
      $region49: #{peft_causal_lm_forward.1} parent=5 // pred_check
        %p303 = pneg %p302
      $region50: #{peft_causal_lm_forward.1} parent=5 // pred_check_branch
        %305 = sbr.rel (%p303) target = $region52
      $region51: #{peft_causal_lm_forward.1} parent=5 // pred_region
        // Predicated region
        $region53: #{peft_causal_lm_forward.1} parent=51 // pred_check
          %p306 = pneg %p39
        $region54: #{peft_causal_lm_forward.1} parent=51 // pred_check_branch
          %308 = sbr.rel (%p306) target = $region56
        $region55: #{peft_causal_lm_forward.1} parent=51 // pred_region
          %p309 = scmp.lt.s32.totalorder %s19, 1
          %s310 = scalar_select %p309, %s19, 1
          %s311 = smul.addr %s310, 8
          %s312 = scalar_lea.vmem %s0, %s311
        $region56: #{peft_causal_lm_forward.1} parent=51 // pred_fallthru
          _
      $region52: #{peft_causal_lm_forward.1} parent=5 // pred_fallthru
        _
      %p313 = scmp.le.s32.totalorder 1, %s19
      %p314 = scmp.lt.s32.totalorder %s19, 3
      %p315 = pnand %p313, %p314
      %p316 = pneg %p315
      // Predicated region
      $region57: #{peft_causal_lm_forward.1} parent=5 // pred_check
        _
      $region58: #{peft_causal_lm_forward.1} parent=5 // pred_check_branch
        %318 = sbr.rel (%p315) target = $region60
      $region59: #{peft_causal_lm_forward.1} parent=5 // pred_region
        %s319 = ssub.s32 %s19, 1
        %p320 = scmp.lt.s32.totalorder %s24, 1
        %s321 = scalar_select %p320, %s24, 1
        %s322 = smul.addr %s321, 8
        %s323 = scalar_lea.vmem %s0, %s322
        %p324 = pneg %p45
        %p325 = pneg %p42
        %p326 = pneg %p66
        %p327 = pneg %p63
        %p328 = pneg %p87
        %p329 = pneg %p84
        %p330 = pneg %p108
        %p331 = pneg %p105
        %p332 = pneg %p129
        %p333 = pneg %p126
        %p334 = pneg %p150
        %p335 = pneg %p147
        %p336 = pneg %p171
        %p337 = pneg %p168
        %p338 = pneg %p192
        %p339 = pneg %p189
        %p340 = pneg %p213
        %p341 = pneg %p210
        %p342 = pneg %p234
        %p343 = pneg %p231
        %p344 = pneg %p260
        %p345 = pneg %p257
        %s346 = sand.u32 %s247, 1
        %s347 = scalar_lea.sflag [#allocation3], %s346
        %s348 = sand.u32 %s247, 1
        %s349 = smul.addr %s348, 8
        %s350 = scalar_lea.vmem [#allocation2], %s349
        %p351 = scmp.lt.s32.totalorder %s24, 1
        %s352 = scalar_select %p351, %s24, 1
        %s353 = smul.addr %s352, 8
        %s354 = scalar_lea.vmem %s0, %s353
        %v356 = vld [vmem:[%s354] sm:$0xff]
        %v357 = vlaneseq
        %v358 = vand.u32 %v357, 127
        %359 = vset.pattern.permute.xlu0 0
        %360 = vperm.xlu0 %359, %v356
        %v361 = vpop.permute.xlu0 %360
        %vm362 = vcmp.eq.s32.totalorder %v361, %v358
        %v363 = vsel %vm362, 1, 0
        %v364 = vcvt.s32.f32 %v363
        %v365 = vld [vmem:[%s1] sm:$0xff]
        %v366 = vld [vmem:[%s1 + $0x8] sm:$0xff]
        %v367 = vld [vmem:[%s1 + $0x10] sm:$0xff]
        %v368 = vld [vmem:[%s1 + $0x18] sm:$0xff]
        %v369 = vld [vmem:[%s1 + $0x20] sm:$0xff]
        %v370 = vld [vmem:[%s1 + $0x28] sm:$0xff]
        %v371 = vld [vmem:[%s1 + $0x30] sm:$0xff]
        %v372 = vld [vmem:[%s1 + $0x38] sm:$0xff]
        %v373 = vld [vmem:[%s1 + $0x40] sm:$0xff]
        %v374 = vld [vmem:[%s1 + $0x48] sm:$0xff]
        %v375 = vld [vmem:[%s1 + $0x50] sm:$0xff]
        %v376 = vld [vmem:[%s1 + $0x58] sm:$0xff]
        %v377 = vld [vmem:[%s1 + $0x60] sm:$0xff]
        %v378 = vld [vmem:[%s1 + $0x68] sm:$0xff]
        %v379 = vld [vmem:[%s1 + $0x70] sm:$0xff]
        %v380 = vld [vmem:[%s1 + $0x78] sm:$0xff]
        %381 = vmatprep.subr.mxu0 0.0
        %382 = vmatpush1.msra.mxu0 %v380
        %383 = vmatprep.subr.mxu0 0.0
        %384 = vmatpush1.msra.mxu0 %v379
        %385 = vmatprep.subr.mxu0 0.0
        %386 = vmatpush1.msra.mxu0 %v378
        %387 = vmatprep.subr.mxu0 0.0
        %388 = vmatpush1.msra.mxu0 %v377
        %389 = vmatprep.subr.mxu0 0.0
        %390 = vmatpush1.msra.mxu0 %v376
        %391 = vmatprep.subr.mxu0 0.0
        %392 = vmatpush1.msra.mxu0 %v375
        %393 = vmatprep.subr.mxu0 0.0
        %394 = vmatpush1.msra.mxu0 %v374
        %395 = vmatprep.subr.mxu0 0.0
        %396 = vmatpush1.msra.mxu0 %v373
        %397 = vmatprep.subr.mxu0 0.0
        %398 = vmatpush1.msra.mxu0 %v372
        %399 = vmatprep.subr.mxu0 0.0
        %400 = vmatpush1.msra.mxu0 %v371
        %401 = vmatprep.subr.mxu0 0.0
        %402 = vmatpush1.msra.mxu0 %v370
        %403 = vmatprep.subr.mxu0 0.0
        %404 = vmatpush1.msra.mxu0 %v369
        %405 = vmatprep.subr.mxu0 0.0
        %406 = vmatpush1.msra.mxu0 %v368
        %407 = vmatprep.subr.mxu0 0.0
        %408 = vmatpush1.msra.mxu0 %v367
        %409 = vmatprep.subr.mxu0 0.0
        %410 = vmatpush1.msra.mxu0 %v366
        %411 = vmatprep.subr.mxu0 0.0
        %412 = vmatpush1.msra.mxu0 %v365
        %413 = vmatprep.subr.mxu0 0.0
        %414 = vmatpush2.msra.mxu0 0.0
        %415 = vmatprep.subr.mxu0 0.0
        %416 = vmatpush2.msra.mxu0 0.0
        %417 = vmatprep.subr.mxu0 0.0
        %418 = vmatpush2.msra.mxu0 0.0
        %419 = vmatprep.subr.mxu0 0.0
        %420 = vmatpush2.msra.mxu0 0.0
        %421 = vmatprep.subr.mxu0 0.0
        %422 = vmatpush2.msra.mxu0 0.0
        %423 = vmatprep.subr.mxu0 0.0
        %424 = vmatpush2.msra.mxu0 0.0
        %425 = vmatprep.subr.mxu0 0.0
        %426 = vmatpush2.msra.mxu0 0.0
        %427 = vmatprep.subr.mxu0 0.0
        %428 = vmatpush2.msra.mxu0 0.0
        %429 = vmatprep.subr.mxu0 0.0
        %430 = vmatpush2.msra.mxu0 0.0
        %431 = vmatprep.subr.mxu0 0.0
        %432 = vmatpush2.msra.mxu0 0.0
        %433 = vmatprep.subr.mxu0 0.0
        %434 = vmatpush2.msra.mxu0 0.0
        %435 = vmatprep.subr.mxu0 0.0
        %436 = vmatpush2.msra.mxu0 0.0
        %437 = vmatprep.subr.mxu0 0.0
        %438 = vmatpush2.msra.mxu0 0.0
        %439 = vmatprep.subr.mxu0 0.0
        %440 = vmatpush2.msra.mxu0 0.0
        %441 = vmatprep.subr.mxu0 0.0
        %442 = vmatpush2.msra.mxu0 0.0
        %443 = vmatprep.subr.mxu0 0.0
        %444 = vmatpush2.msra.mxu0 0.0
        %445 = vmatprep.mubr.f32.mxu0 0.0
        %446 = vmatmul.mubr.f32.gmra.mxu0 %v364
        %v447 = vpop.f32.mrf.mxu0
        %v448 = vadd.f32 0.0, %v447
        %v449 = vpop.f32.mrf.mxu0
        %450 = vdwg.mxu0
        %v451 = vlaneseq
        %v452 = vshrl.u32 %v451, 7
        %vm453 = vcmp.ge.s32.totalorder %v452, %v358
        %v454 = vld [vmem:[%s2] sm:$0x1]
        %v455 = vmul.f32 %v448, %v448
        %vm456 = vcmask 261120
        %v457 = vsel %vm456, %v455, 0.0
        %458 = vadd.xlane.f32.xlu0 %v457
        %v459 = vpop.xlane.xlu0 %458
        %v460 = vrcp.pop 32.0
        %v461 = vmul.f32 %v459, %v460
        %v462 = vadd.f32 %v461, 1e-06
        %v463 = vrsqrt.pop %v462
        %v464 = vmul.f32 %v448, %v463
        %v466 = vlaneseq
        %v467 = vshrl.u32 %v466, 7
        %v468 = vsub.s32 0, %v467
        %v469 = vrot.slane %v454, %v468
        %v471 = vmul.f32 %v464, %v469
        %v472 = vpack.c.bf16 %v471, %v471
        %v473 = vld [vmem:[%s3] sm:$0xf]
        %v474 = vld [vmem:[%s3 + $0x4] sm:$0xf]
        %v475 = vld [vmem:[%s3 + $0x8] sm:$0xf]
        %v476 = vld [vmem:[%s3 + $0xc] sm:$0xf]
        %v481 = vunpack.c.l.b16 %v473
        %v482 = vunpack.c.l.b16 %v474
        %v483 = vunpack.c.l.b16 %v475
        %v484 = vunpack.c.l.b16 %v476
        %v485 = vpack.c.b16 %v482, %v481
        %v486 = vpack.c.b16 %v484, %v483
        %v490 = vsel %vm456, %v472, 0
        %492 = vmatprep.subr.bf16.mxu0 0
        %493 = vmatpush1.bf16.msra.mxu0 0
        %494 = vmatprep.subr.bf16.mxu0 0
        %495 = vmatpush1.bf16.msra.mxu0 0
        %496 = vmatprep.subr.bf16.mxu0 0
        %497 = vmatpush1.bf16.msra.mxu0 0
        %498 = vmatprep.subr.bf16.mxu0 0
        %499 = vmatpush1.bf16.msra.mxu0 0
        %500 = vmatprep.subr.bf16.mxu0 0
        %501 = vmatpush1.bf16.msra.mxu0 0
        %502 = vmatprep.subr.bf16.mxu0 0
        %503 = vmatpush1.bf16.msra.mxu0 0
        %504 = vmatprep.subr.bf16.mxu0 0
        %505 = vmatpush1.bf16.msra.mxu0 %v486
        %506 = vmatprep.subr.bf16.mxu0 0
        %507 = vmatpush1.bf16.msra.mxu0 %v485
        %508 = vmatprep.subr.bf16.mxu0 0
        %509 = vmatpush2.bf16.msra.mxu0 0
        %510 = vmatprep.subr.bf16.mxu0 0
        %511 = vmatpush2.bf16.msra.mxu0 0
        %512 = vmatprep.subr.bf16.mxu0 0
        %513 = vmatpush2.bf16.msra.mxu0 0
        %514 = vmatprep.subr.bf16.mxu0 0
        %515 = vmatpush2.bf16.msra.mxu0 0
        %516 = vmatprep.subr.bf16.mxu0 0
        %517 = vmatpush2.bf16.msra.mxu0 0
        %518 = vmatprep.subr.bf16.mxu0 0
        %519 = vmatpush2.bf16.msra.mxu0 0
        %520 = vmatprep.subr.bf16.mxu0 0
        %521 = vmatpush2.bf16.msra.mxu0 0
        %522 = vmatprep.subr.bf16.mxu0 0
        %523 = vmatpush2.bf16.msra.mxu0 0
        %524 = vmatprep.mubr.bf16.mxu0 0
        %525 = vmatmul.mubr.bf16.gmra.mxu0 %v490
        %v526 = vpop.f32.mrf.mxu0
        %v527 = vadd.f32 0.0, %v526
        %v528 = vpop.f32.mrf.mxu0
        %v529 = vpop.f32.mrf.mxu0
        %v530 = vpop.f32.mrf.mxu0
        %531 = vdwg.mxu0
        %v532 = vpack.c.bf16 %v527, %v527
        %534 = vrot.lane.b32.xlu0 %v532, 96
        %v535 = vpop.permute.xlu0 %534
        %vm536 = vcmask 64512
        %v538 = vsel %vm536, %v532, 0
        %v541 = vsel %vm536, %v535, 0
        %543 = vmatprep.subr.bf16.mxu0 0
        %544 = vmatpush1.bf16.xpose.msra.mxu0 0
        %545 = vmatprep.subr.bf16.mxu0 0
        %546 = vmatpush1.bf16.xpose.msra.mxu0 0
        %547 = vmatprep.subr.bf16.mxu0 0
        %548 = vmatpush1.bf16.xpose.msra.mxu0 0
        %549 = vmatprep.subr.bf16.mxu0 0
        %550 = vmatpush1.bf16.xpose.msra.mxu0 0
        %551 = vmatprep.subr.bf16.mxu0 0
        %552 = vmatpush1.bf16.xpose.msra.mxu0 0
        %553 = vmatprep.subr.bf16.mxu0 0
        %554 = vmatpush1.bf16.xpose.msra.mxu0 0
        %555 = vmatprep.subr.bf16.mxu0 0
        %556 = vmatpush1.bf16.xpose.msra.mxu0 0
        %557 = vmatprep.subr.bf16.mxu0 0
        %558 = vmatpush1.bf16.xpose.msra.mxu0 %v541
        %559 = vmatprep.subr.bf16.mxu0 0
        %560 = vmatpush2.bf16.xpose.msra.mxu0 0
        %561 = vmatprep.subr.bf16.mxu0 0
        %562 = vmatpush2.bf16.xpose.msra.mxu0 0
        %563 = vmatprep.subr.bf16.mxu0 0
        %564 = vmatpush2.bf16.xpose.msra.mxu0 0
        %565 = vmatprep.subr.bf16.mxu0 0
        %566 = vmatpush2.bf16.xpose.msra.mxu0 0
        %567 = vmatprep.subr.bf16.mxu0 0
        %568 = vmatpush2.bf16.xpose.msra.mxu0 0
        %569 = vmatprep.subr.bf16.mxu0 0
        %570 = vmatpush2.bf16.xpose.msra.mxu0 0
        %571 = vmatprep.subr.bf16.mxu0 0
        %572 = vmatpush2.bf16.xpose.msra.mxu0 0
        %573 = vmatprep.subr.bf16.mxu0 0
        %574 = vmatpush2.bf16.xpose.msra.mxu0 0
        %575 = vmatprep.mubr.bf16.mxu0 0
        %576 = vmatmul.mubr.bf16.gmra.mxu0 %v538
        %v577 = vpop.f32.mrf.mxu0
        %v578 = vadd.f32 0.0, %v577
        %v579 = vpop.f32.mrf.mxu0
        %v580 = vpop.f32.mrf.mxu0
        %v581 = vpop.f32.mrf.mxu0
        %582 = vdwg.mxu0
        %v583 = vsel %vm453, %v578, -1e+30
        %v584 = vsel %vm536, %v583, -inf
        %585 = vmax.xlane.f32.xlu0 %v584
        %v586 = vpop.xlane.xlu0 %585
        %v587 = vsub.f32 %v583, %v586
        %v588 = vmul.f32 %v587, 1.442695
        %v589 = vpow.pop %v588
        %v590 = vsel %vm536, %v589, 0.0
        %591 = vadd.xlane.f32.xlu0 %v590
        %v592 = vpop.xlane.xlu0 %591
        %v593 = vrcp.pop %v592
        %v594 = vmul.f32 %v589, %v593
        %v595 = vpack.c.bf16 %v594, %v594
        %596 = vrot.lane.b32.xlu0 %v532, 64
        %v597 = vpop.permute.xlu0 %596
        %v599 = vsel %vm536, %v595, 0
        %vm601 = vcmask 1043456
        %v603 = vsel %vm601, %v597, 0
        %605 = vmatprep.subr.bf16.mxu0 0
        %606 = vmatpush1.bf16.msra.mxu0 0
        %607 = vmatprep.subr.bf16.mxu0 0
        %608 = vmatpush1.bf16.msra.mxu0 0
        %609 = vmatprep.subr.bf16.mxu0 0
        %610 = vmatpush1.bf16.msra.mxu0 0
        %611 = vmatprep.subr.bf16.mxu0 0
        %612 = vmatpush1.bf16.msra.mxu0 0
        %613 = vmatprep.subr.bf16.mxu0 0
        %614 = vmatpush1.bf16.msra.mxu0 0
        %615 = vmatprep.subr.bf16.mxu0 0
        %616 = vmatpush1.bf16.msra.mxu0 0
        %617 = vmatprep.subr.bf16.mxu0 0
        %618 = vmatpush1.bf16.msra.mxu0 0
        %619 = vmatprep.subr.bf16.mxu0 0
        %620 = vmatpush1.bf16.msra.mxu0 %v603
        %621 = vmatprep.subr.bf16.mxu0 0
        %622 = vmatpush2.bf16.msra.mxu0 0
        %623 = vmatprep.subr.bf16.mxu0 0
        %624 = vmatpush2.bf16.msra.mxu0 0
        %625 = vmatprep.subr.bf16.mxu0 0
        %626 = vmatpush2.bf16.msra.mxu0 0
        %627 = vmatprep.subr.bf16.mxu0 0
        %628 = vmatpush2.bf16.msra.mxu0 0
        %629 = vmatprep.subr.bf16.mxu0 0
        %630 = vmatpush2.bf16.msra.mxu0 0
        %631 = vmatprep.subr.bf16.mxu0 0
        %632 = vmatpush2.bf16.msra.mxu0 0
        %633 = vmatprep.subr.bf16.mxu0 0
        %634 = vmatpush2.bf16.msra.mxu0 0
        %635 = vmatprep.subr.bf16.mxu0 0
        %636 = vmatpush2.bf16.msra.mxu0 0
        %637 = vmatprep.mubr.bf16.mxu0 0
        %638 = vmatmul.mubr.bf16.gmra.mxu0 %v599
        %v639 = vpop.f32.mrf.mxu0
        %v640 = vadd.f32 0.0, %v639
        %v641 = vpop.f32.mrf.mxu0
        %v642 = vpop.f32.mrf.mxu0
        %v643 = vpop.f32.mrf.mxu0
        %644 = vdwg.mxu0
        %645 = vrot.lane.b32.xlu0 %v532, 120
        %v646 = vpop.permute.xlu0 %645
        %647 = vrot.lane.b32.xlu0 %v532, 88
        %v648 = vpop.permute.xlu0 %647
        %v650 = vsel %vm536, %v646, 0
        %v653 = vsel %vm536, %v648, 0
        %655 = vmatprep.subr.bf16.mxu0 0
        %656 = vmatpush1.bf16.xpose.msra.mxu0 0
        %657 = vmatprep.subr.bf16.mxu0 0
        %658 = vmatpush1.bf16.xpose.msra.mxu0 0
        %659 = vmatprep.subr.bf16.mxu0 0
        %660 = vmatpush1.bf16.xpose.msra.mxu0 0
        %661 = vmatprep.subr.bf16.mxu0 0
        %662 = vmatpush1.bf16.xpose.msra.mxu0 0
        %663 = vmatprep.subr.bf16.mxu0 0
        %664 = vmatpush1.bf16.xpose.msra.mxu0 0
        %665 = vmatprep.subr.bf16.mxu0 0
        %666 = vmatpush1.bf16.xpose.msra.mxu0 0
        %667 = vmatprep.subr.bf16.mxu0 0
        %668 = vmatpush1.bf16.xpose.msra.mxu0 0
        %669 = vmatprep.subr.bf16.mxu0 0
        %670 = vmatpush1.bf16.xpose.msra.mxu0 %v653
        %671 = vmatprep.subr.bf16.mxu0 0
        %672 = vmatpush2.bf16.xpose.msra.mxu0 0
        %673 = vmatprep.subr.bf16.mxu0 0
        %674 = vmatpush2.bf16.xpose.msra.mxu0 0
        %675 = vmatprep.subr.bf16.mxu0 0
        %676 = vmatpush2.bf16.xpose.msra.mxu0 0
        %677 = vmatprep.subr.bf16.mxu0 0
        %678 = vmatpush2.bf16.xpose.msra.mxu0 0
        %679 = vmatprep.subr.bf16.mxu0 0
        %680 = vmatpush2.bf16.xpose.msra.mxu0 0
        %681 = vmatprep.subr.bf16.mxu0 0
        %682 = vmatpush2.bf16.xpose.msra.mxu0 0
        %683 = vmatprep.subr.bf16.mxu0 0
        %684 = vmatpush2.bf16.xpose.msra.mxu0 0
        %685 = vmatprep.subr.bf16.mxu0 0
        %686 = vmatpush2.bf16.xpose.msra.mxu0 0
        %687 = vmatprep.mubr.bf16.mxu0 0
        %688 = vmatmul.mubr.bf16.gmra.mxu0 %v650
        %v689 = vpop.f32.mrf.mxu0
        %v690 = vadd.f32 0.0, %v689
        %v691 = vpop.f32.mrf.mxu0
        %v692 = vpop.f32.mrf.mxu0
        %v693 = vpop.f32.mrf.mxu0
        %694 = vdwg.mxu0
        %v695 = vsel %vm453, %v690, -1e+30
        %v696 = vsel %vm536, %v695, -inf
        %697 = vmax.xlane.f32.xlu0 %v696
        %v698 = vpop.xlane.xlu0 %697
        %v699 = vsub.f32 %v695, %v698
        %v700 = vmul.f32 %v699, 1.442695
        %v701 = vpow.pop %v700
        %v702 = vsel %vm536, %v701, 0.0
        %703 = vadd.xlane.f32.xlu0 %v702
        %v704 = vpop.xlane.xlu0 %703
        %v705 = vrcp.pop %v704
        %v706 = vmul.f32 %v701, %v705
        %v707 = vpack.c.bf16 %v706, %v706
        %708 = vrot.lane.b32.xlu0 %v532, 56
        %v709 = vpop.permute.xlu0 %708
        %v711 = vsel %vm536, %v707, 0
        %v714 = vsel %vm601, %v709, 0
        %716 = vmatprep.subr.bf16.mxu0 0
        %717 = vmatpush1.bf16.msra.mxu0 0
        %718 = vmatprep.subr.bf16.mxu0 0
        %719 = vmatpush1.bf16.msra.mxu0 0
        %720 = vmatprep.subr.bf16.mxu0 0
        %721 = vmatpush1.bf16.msra.mxu0 0
        %722 = vmatprep.subr.bf16.mxu0 0
        %723 = vmatpush1.bf16.msra.mxu0 0
        %724 = vmatprep.subr.bf16.mxu0 0
        %725 = vmatpush1.bf16.msra.mxu0 0
        %726 = vmatprep.subr.bf16.mxu0 0
        %727 = vmatpush1.bf16.msra.mxu0 0
        %728 = vmatprep.subr.bf16.mxu0 0
        %729 = vmatpush1.bf16.msra.mxu0 0
        %730 = vmatprep.subr.bf16.mxu0 0
        %731 = vmatpush1.bf16.msra.mxu0 %v714
        %732 = vmatprep.subr.bf16.mxu0 0
        %733 = vmatpush2.bf16.msra.mxu0 0
        %734 = vmatprep.subr.bf16.mxu0 0
        %735 = vmatpush2.bf16.msra.mxu0 0
        %736 = vmatprep.subr.bf16.mxu0 0
        %737 = vmatpush2.bf16.msra.mxu0 0
        %738 = vmatprep.subr.bf16.mxu0 0
        %739 = vmatpush2.bf16.msra.mxu0 0
        %740 = vmatprep.subr.bf16.mxu0 0
        %741 = vmatpush2.bf16.msra.mxu0 0
        %742 = vmatprep.subr.bf16.mxu0 0
        %743 = vmatpush2.bf16.msra.mxu0 0
        %744 = vmatprep.subr.bf16.mxu0 0
        %745 = vmatpush2.bf16.msra.mxu0 0
        %746 = vmatprep.subr.bf16.mxu0 0
        %747 = vmatpush2.bf16.msra.mxu0 0
        %748 = vmatprep.mubr.bf16.mxu0 0
        %749 = vmatmul.mubr.bf16.gmra.mxu0 %v711
        %v750 = vpop.f32.mrf.mxu0
        %v751 = vadd.f32 0.0, %v750
        %v752 = vpop.f32.mrf.mxu0
        %v753 = vpop.f32.mrf.mxu0
        %v754 = vpop.f32.mrf.mxu0
        %755 = vdwg.mxu0
        %756 = vrot.lane.b32.xlu0 %v532, 112
        %v757 = vpop.permute.xlu0 %756
        %758 = vrot.lane.b32.xlu0 %v532, 80
        %v759 = vpop.permute.xlu0 %758
        %v761 = vsel %vm536, %v757, 0
        %v764 = vsel %vm536, %v759, 0
        %766 = vmatprep.subr.bf16.mxu0 0
        %767 = vmatpush1.bf16.xpose.msra.mxu0 0
        %768 = vmatprep.subr.bf16.mxu0 0
        %769 = vmatpush1.bf16.xpose.msra.mxu0 0
        %770 = vmatprep.subr.bf16.mxu0 0
        %771 = vmatpush1.bf16.xpose.msra.mxu0 0
        %772 = vmatprep.subr.bf16.mxu0 0
        %773 = vmatpush1.bf16.xpose.msra.mxu0 0
        %774 = vmatprep.subr.bf16.mxu0 0
        %775 = vmatpush1.bf16.xpose.msra.mxu0 0
        %776 = vmatprep.subr.bf16.mxu0 0
        %777 = vmatpush1.bf16.xpose.msra.mxu0 0
        %778 = vmatprep.subr.bf16.mxu0 0
        %779 = vmatpush1.bf16.xpose.msra.mxu0 0
        %780 = vmatprep.subr.bf16.mxu0 0
        %781 = vmatpush1.bf16.xpose.msra.mxu0 %v764
        %782 = vmatprep.subr.bf16.mxu0 0
        %783 = vmatpush2.bf16.xpose.msra.mxu0 0
        %784 = vmatprep.subr.bf16.mxu0 0
        %785 = vmatpush2.bf16.xpose.msra.mxu0 0
        %786 = vmatprep.subr.bf16.mxu0 0
        %787 = vmatpush2.bf16.xpose.msra.mxu0 0
        %788 = vmatprep.subr.bf16.mxu0 0
        %789 = vmatpush2.bf16.xpose.msra.mxu0 0
        %790 = vmatprep.subr.bf16.mxu0 0
        %791 = vmatpush2.bf16.xpose.msra.mxu0 0
        %792 = vmatprep.subr.bf16.mxu0 0
        %793 = vmatpush2.bf16.xpose.msra.mxu0 0
        %794 = vmatprep.subr.bf16.mxu0 0
        %795 = vmatpush2.bf16.xpose.msra.mxu0 0
        %796 = vmatprep.subr.bf16.mxu0 0
        %797 = vmatpush2.bf16.xpose.msra.mxu0 0
        %798 = vmatprep.mubr.bf16.mxu0 0
        %799 = vmatmul.mubr.bf16.gmra.mxu0 %v761
        %v800 = vpop.f32.mrf.mxu0
        %v801 = vadd.f32 0.0, %v800
        %v802 = vpop.f32.mrf.mxu0
        %v803 = vpop.f32.mrf.mxu0
        %v804 = vpop.f32.mrf.mxu0
        %805 = vdwg.mxu0
        %v806 = vsel %vm453, %v801, -1e+30
        %v807 = vsel %vm536, %v806, -inf
        %808 = vmax.xlane.f32.xlu0 %v807
        %v809 = vpop.xlane.xlu0 %808
        %v810 = vsub.f32 %v806, %v809
        %v811 = vmul.f32 %v810, 1.442695
        %v812 = vpow.pop %v811
        %v813 = vsel %vm536, %v812, 0.0
        %814 = vadd.xlane.f32.xlu0 %v813
        %v815 = vpop.xlane.xlu0 %814
        %v816 = vrcp.pop %v815
        %v817 = vmul.f32 %v812, %v816
        %v818 = vpack.c.bf16 %v817, %v817
        %819 = vrot.lane.b32.xlu0 %v532, 48
        %v820 = vpop.permute.xlu0 %819
        %v822 = vsel %vm536, %v818, 0
        %v825 = vsel %vm601, %v820, 0
        %827 = vmatprep.subr.bf16.mxu0 0
        %828 = vmatpush1.bf16.msra.mxu0 0
        %829 = vmatprep.subr.bf16.mxu0 0
        %830 = vmatpush1.bf16.msra.mxu0 0
        %831 = vmatprep.subr.bf16.mxu0 0
        %832 = vmatpush1.bf16.msra.mxu0 0
        %833 = vmatprep.subr.bf16.mxu0 0
        %834 = vmatpush1.bf16.msra.mxu0 0
        %835 = vmatprep.subr.bf16.mxu0 0
        %836 = vmatpush1.bf16.msra.mxu0 0
        %837 = vmatprep.subr.bf16.mxu0 0
        %838 = vmatpush1.bf16.msra.mxu0 0
        %839 = vmatprep.subr.bf16.mxu0 0
        %840 = vmatpush1.bf16.msra.mxu0 0
        %841 = vmatprep.subr.bf16.mxu0 0
        %842 = vmatpush1.bf16.msra.mxu0 %v825
        %843 = vmatprep.subr.bf16.mxu0 0
        %844 = vmatpush2.bf16.msra.mxu0 0
        %845 = vmatprep.subr.bf16.mxu0 0
        %846 = vmatpush2.bf16.msra.mxu0 0
        %847 = vmatprep.subr.bf16.mxu0 0
        %848 = vmatpush2.bf16.msra.mxu0 0
        %849 = vmatprep.subr.bf16.mxu0 0
        %850 = vmatpush2.bf16.msra.mxu0 0
        %851 = vmatprep.subr.bf16.mxu0 0
        %852 = vmatpush2.bf16.msra.mxu0 0
        %853 = vmatprep.subr.bf16.mxu0 0
        %854 = vmatpush2.bf16.msra.mxu0 0
        %855 = vmatprep.subr.bf16.mxu0 0
        %856 = vmatpush2.bf16.msra.mxu0 0
        %857 = vmatprep.subr.bf16.mxu0 0
        %858 = vmatpush2.bf16.msra.mxu0 0
        %859 = vmatprep.mubr.bf16.mxu0 0
        %860 = vmatmul.mubr.bf16.gmra.mxu0 %v822
        %v861 = vpop.f32.mrf.mxu0
        %v862 = vadd.f32 0.0, %v861
        %v863 = vpop.f32.mrf.mxu0
        %v864 = vpop.f32.mrf.mxu0
        %v865 = vpop.f32.mrf.mxu0
        %866 = vdwg.mxu0
        %867 = vrot.lane.b32.xlu0 %v532, 104
        %v868 = vpop.permute.xlu0 %867
        %869 = vrot.lane.b32.xlu0 %v532, 72
        %v870 = vpop.permute.xlu0 %869
        %v872 = vsel %vm536, %v868, 0
        %v875 = vsel %vm536, %v870, 0
        %877 = vmatprep.subr.bf16.mxu0 0
        %878 = vmatpush1.bf16.xpose.msra.mxu0 0
        %879 = vmatprep.subr.bf16.mxu0 0
        %880 = vmatpush1.bf16.xpose.msra.mxu0 0
        %881 = vmatprep.subr.bf16.mxu0 0
        %882 = vmatpush1.bf16.xpose.msra.mxu0 0
        %883 = vmatprep.subr.bf16.mxu0 0
        %884 = vmatpush1.bf16.xpose.msra.mxu0 0
        %885 = vmatprep.subr.bf16.mxu0 0
        %886 = vmatpush1.bf16.xpose.msra.mxu0 0
        %887 = vmatprep.subr.bf16.mxu0 0
        %888 = vmatpush1.bf16.xpose.msra.mxu0 0
        %889 = vmatprep.subr.bf16.mxu0 0
        %890 = vmatpush1.bf16.xpose.msra.mxu0 0
        %891 = vmatprep.subr.bf16.mxu0 0
        %892 = vmatpush1.bf16.xpose.msra.mxu0 %v875
        %893 = vmatprep.subr.bf16.mxu0 0
        %894 = vmatpush2.bf16.xpose.msra.mxu0 0
        %895 = vmatprep.subr.bf16.mxu0 0
        %896 = vmatpush2.bf16.xpose.msra.mxu0 0
        %897 = vmatprep.subr.bf16.mxu0 0
        %898 = vmatpush2.bf16.xpose.msra.mxu0 0
        %899 = vmatprep.subr.bf16.mxu0 0
        %900 = vmatpush2.bf16.xpose.msra.mxu0 0
        %901 = vmatprep.subr.bf16.mxu0 0
        %902 = vmatpush2.bf16.xpose.msra.mxu0 0
        %903 = vmatprep.subr.bf16.mxu0 0
        %904 = vmatpush2.bf16.xpose.msra.mxu0 0
        %905 = vmatprep.subr.bf16.mxu0 0
        %906 = vmatpush2.bf16.xpose.msra.mxu0 0
        %907 = vmatprep.subr.bf16.mxu0 0
        %908 = vmatpush2.bf16.xpose.msra.mxu0 0
        %909 = vmatprep.mubr.bf16.mxu0 0
        %910 = vmatmul.mubr.bf16.gmra.mxu0 %v872
        %v911 = vpop.f32.mrf.mxu0
        %v912 = vadd.f32 0.0, %v911
        %v913 = vpop.f32.mrf.mxu0
        %v914 = vpop.f32.mrf.mxu0
        %v915 = vpop.f32.mrf.mxu0
        %916 = vdwg.mxu0
        %v917 = vsel %vm453, %v912, -1e+30
        %v918 = vsel %vm536, %v917, -inf
        %919 = vmax.xlane.f32.xlu0 %v918
        %v920 = vpop.xlane.xlu0 %919
        %v921 = vsub.f32 %v917, %v920
        %v922 = vmul.f32 %v921, 1.442695
        %v923 = vpow.pop %v922
        %v924 = vsel %vm536, %v923, 0.0
        %925 = vadd.xlane.f32.xlu0 %v924
        %v926 = vpop.xlane.xlu0 %925
        %v927 = vrcp.pop %v926
        %v928 = vmul.f32 %v923, %v927
        %v929 = vpack.c.bf16 %v928, %v928
        %930 = vrot.lane.b32.xlu0 %v532, 40
        %v931 = vpop.permute.xlu0 %930
        %v933 = vsel %vm536, %v929, 0
        %v936 = vsel %vm601, %v931, 0
        %938 = vmatprep.subr.bf16.mxu0 0
        %939 = vmatpush1.bf16.msra.mxu0 0
        %940 = vmatprep.subr.bf16.mxu0 0
        %941 = vmatpush1.bf16.msra.mxu0 0
        %942 = vmatprep.subr.bf16.mxu0 0
        %943 = vmatpush1.bf16.msra.mxu0 0
        %944 = vmatprep.subr.bf16.mxu0 0
        %945 = vmatpush1.bf16.msra.mxu0 0
        %946 = vmatprep.subr.bf16.mxu0 0
        %947 = vmatpush1.bf16.msra.mxu0 0
        %948 = vmatprep.subr.bf16.mxu0 0
        %949 = vmatpush1.bf16.msra.mxu0 0
        %950 = vmatprep.subr.bf16.mxu0 0
        %951 = vmatpush1.bf16.msra.mxu0 0
        %952 = vmatprep.subr.bf16.mxu0 0
        %953 = vmatpush1.bf16.msra.mxu0 %v936
        %954 = vmatprep.subr.bf16.mxu0 0
        %955 = vmatpush2.bf16.msra.mxu0 0
        %956 = vmatprep.subr.bf16.mxu0 0
        %957 = vmatpush2.bf16.msra.mxu0 0
        %958 = vmatprep.subr.bf16.mxu0 0
        %959 = vmatpush2.bf16.msra.mxu0 0
        %960 = vmatprep.subr.bf16.mxu0 0
        %961 = vmatpush2.bf16.msra.mxu0 0
        %962 = vmatprep.subr.bf16.mxu0 0
        %963 = vmatpush2.bf16.msra.mxu0 0
        %964 = vmatprep.subr.bf16.mxu0 0
        %965 = vmatpush2.bf16.msra.mxu0 0
        %966 = vmatprep.subr.bf16.mxu0 0
        %967 = vmatpush2.bf16.msra.mxu0 0
        %968 = vmatprep.subr.bf16.mxu0 0
        %969 = vmatpush2.bf16.msra.mxu0 0
        %970 = vmatprep.mubr.bf16.mxu0 0
        %971 = vmatmul.mubr.bf16.gmra.mxu0 %v933
        %v972 = vpop.f32.mrf.mxu0
        %v973 = vadd.f32 0.0, %v972
        %v974 = vpop.f32.mrf.mxu0
        %v975 = vpop.f32.mrf.mxu0
        %v976 = vpop.f32.mrf.mxu0
        %977 = vdwg.mxu0
        %979 = vrot.lane.b32.xlu0 %v751, 8
        %v980 = vpop.permute.xlu0 %979
        %983 = vrot.lane.b32.xlu0 %v862, 16
        %v984 = vpop.permute.xlu0 %983
        %987 = vrot.lane.b32.xlu0 %v973, 24
        %v988 = vpop.permute.xlu0 %987
        %v990 = vsel %vm536, %v640, %v980
        %vm991 = vcmask 130048
        %v992 = vsel %vm991, %v990, %v984
        %vm993 = vcmask 195584
        %v994 = vsel %vm993, %v992, %v988
        %v995 = vpack.c.bf16 %v994, %v994
        %v996 = vld [vmem:[%s4] sm:$0xf]
        %v997 = vld [vmem:[%s4 + $0x4] sm:$0xf]
        %v998 = vld [vmem:[%s4 + $0x8] sm:$0xf]
        %v999 = vld [vmem:[%s4 + $0xc] sm:$0xf]
        %v1004 = vunpack.c.l.b16 %v996
        %v1005 = vunpack.c.l.b16 %v997
        %v1006 = vunpack.c.l.b16 %v998
        %v1007 = vunpack.c.l.b16 %v999
        %v1008 = vpack.c.b16 %v1005, %v1004
        %v1009 = vpack.c.b16 %v1007, %v1006
        %v1013 = vsel %vm456, %v995, 0
        %1015 = vmatprep.subr.bf16.mxu0 0
        %1016 = vmatpush1.bf16.msra.mxu0 0
        %1017 = vmatprep.subr.bf16.mxu0 0
        %1018 = vmatpush1.bf16.msra.mxu0 0
        %1019 = vmatprep.subr.bf16.mxu0 0
        %1020 = vmatpush1.bf16.msra.mxu0 0
        %1021 = vmatprep.subr.bf16.mxu0 0
        %1022 = vmatpush1.bf16.msra.mxu0 0
        %1023 = vmatprep.subr.bf16.mxu0 0
        %1024 = vmatpush1.bf16.msra.mxu0 0
        %1025 = vmatprep.subr.bf16.mxu0 0
        %1026 = vmatpush1.bf16.msra.mxu0 0
        %1027 = vmatprep.subr.bf16.mxu0 0
        %1028 = vmatpush1.bf16.msra.mxu0 %v1009
        %1029 = vmatprep.subr.bf16.mxu0 0
        %1030 = vmatpush1.bf16.msra.mxu0 %v1008
        %1031 = vmatprep.subr.bf16.mxu0 0
        %1032 = vmatpush2.bf16.msra.mxu0 0
        %1033 = vmatprep.subr.bf16.mxu0 0
        %1034 = vmatpush2.bf16.msra.mxu0 0
        %1035 = vmatprep.subr.bf16.mxu0 0
        %1036 = vmatpush2.bf16.msra.mxu0 0
        %1037 = vmatprep.subr.bf16.mxu0 0
        %1038 = vmatpush2.bf16.msra.mxu0 0
        %1039 = vmatprep.subr.bf16.mxu0 0
        %1040 = vmatpush2.bf16.msra.mxu0 0
        %1041 = vmatprep.subr.bf16.mxu0 0
        %1042 = vmatpush2.bf16.msra.mxu0 0
        %1043 = vmatprep.subr.bf16.mxu0 0
        %1044 = vmatpush2.bf16.msra.mxu0 0
        %1045 = vmatprep.subr.bf16.mxu0 0
        %1046 = vmatpush2.bf16.msra.mxu0 0
        %1047 = vmatprep.mubr.bf16.mxu0 0
        %1048 = vmatmul.mubr.bf16.gmra.mxu0 %v1013
        %v1049 = vpop.f32.mrf.mxu0
        %v1050 = vadd.f32 0.0, %v1049
        %v1051 = vpop.f32.mrf.mxu0
        %v1052 = vpop.f32.mrf.mxu0
        %v1053 = vpop.f32.mrf.mxu0
        %1054 = vdwg.mxu0
        %v1055 = vadd.f32 %v448, %v1050
        %v1056 = vld [vmem:[%s5] sm:$0x1]
        %v1057 = vmul.f32 %v1055, %v1055
        %v1058 = vsel %vm456, %v1057, 0.0
        %1059 = vadd.xlane.f32.xlu0 %v1058
        %v1060 = vpop.xlane.xlu0 %1059
        %v1061 = vmul.f32 %v1060, %v460
        %v1062 = vadd.f32 %v1061, 1e-06
        %v1063 = vrsqrt.pop %v1062
        %v1064 = vmul.f32 %v1055, %v1063
        %v1066 = vlaneseq
        %v1067 = vshrl.u32 %v1066, 7
        %v1068 = vsub.s32 0, %v1067
        %v1069 = vrot.slane %v1056, %v1068
        %v1071 = vmul.f32 %v1064, %v1069
        %v1072 = vpack.c.bf16 %v1071, %v1071
        %v1073 = vld [vmem:[%s6] sm:$0xf]
        %v1074 = vld [vmem:[%s6 + $0x4] sm:$0xf]
        %v1075 = vld [vmem:[%s6 + $0x8] sm:$0xf]
        %v1076 = vld [vmem:[%s6 + $0xc] sm:$0xf]
        %v1081 = vunpack.c.l.b16 %v1073
        %v1082 = vunpack.c.l.b16 %v1074
        %v1083 = vunpack.c.l.b16 %v1075
        %v1084 = vunpack.c.l.b16 %v1076
        %v1085 = vpack.c.b16 %v1082, %v1081
        %v1086 = vpack.c.b16 %v1084, %v1083
        %v1090 = vsel %vm456, %v1072, 0
        %1092 = vmatprep.subr.bf16.mxu0 0
        %1093 = vmatpush1.bf16.msra.mxu0 0
        %1094 = vmatprep.subr.bf16.mxu0 0
        %1095 = vmatpush1.bf16.msra.mxu0 0
        %1096 = vmatprep.subr.bf16.mxu0 0
        %1097 = vmatpush1.bf16.msra.mxu0 0
        %1098 = vmatprep.subr.bf16.mxu0 0
        %1099 = vmatpush1.bf16.msra.mxu0 0
        %1100 = vmatprep.subr.bf16.mxu0 0
        %1101 = vmatpush1.bf16.msra.mxu0 0
        %1102 = vmatprep.subr.bf16.mxu0 0
        %1103 = vmatpush1.bf16.msra.mxu0 0
        %1104 = vmatprep.subr.bf16.mxu0 0
        %1105 = vmatpush1.bf16.msra.mxu0 %v1086
        %1106 = vmatprep.subr.bf16.mxu0 0
        %1107 = vmatpush1.bf16.msra.mxu0 %v1085
        %1108 = vmatprep.subr.bf16.mxu0 0
        %1109 = vmatpush2.bf16.msra.mxu0 0
        %1110 = vmatprep.subr.bf16.mxu0 0
        %1111 = vmatpush2.bf16.msra.mxu0 0
        %1112 = vmatprep.subr.bf16.mxu0 0
        %1113 = vmatpush2.bf16.msra.mxu0 0
        %1114 = vmatprep.subr.bf16.mxu0 0
        %1115 = vmatpush2.bf16.msra.mxu0 0
        %1116 = vmatprep.subr.bf16.mxu0 0
        %1117 = vmatpush2.bf16.msra.mxu0 0
        %1118 = vmatprep.subr.bf16.mxu0 0
        %1119 = vmatpush2.bf16.msra.mxu0 0
        %1120 = vmatprep.subr.bf16.mxu0 0
        %1121 = vmatpush2.bf16.msra.mxu0 0
        %1122 = vmatprep.subr.bf16.mxu0 0
        %1123 = vmatpush2.bf16.msra.mxu0 0
        %1124 = vmatprep.mubr.bf16.mxu0 0
        %1125 = vmatmul.mubr.bf16.gmra.mxu0 %v1090
        %v1126 = vpop.f32.mrf.mxu0
        %v1127 = vadd.f32 0.0, %v1126
        %v1128 = vpop.f32.mrf.mxu0
        %v1129 = vpop.f32.mrf.mxu0
        %v1130 = vpop.f32.mrf.mxu0
        %1131 = vdwg.mxu0
        %v1132 = vmul.f32 %v1127, %v1127
        %v1133 = vmul.f32 %v1127, %v1132
        %v1134 = vmul.f32 %v1133, 0.044715
        %v1135 = vadd.f32 %v1127, %v1134
        %v1136 = vmul.f32 %v1135, 0.7978846
        %v1137 = vtanh.pop %v1136
        %v1138 = vadd.f32 %v1137, 1.0
        %v1139 = vmul.f32 %v1138, 0.5
        %v1140 = vmul.f32 %v1127, %v1139
        %v1141 = vpack.c.bf16 %v1140, %v1140
        %v1142 = vld [vmem:[%s7] sm:$0xf]
        %v1143 = vld [vmem:[%s7 + $0x4] sm:$0xf]
        %v1144 = vld [vmem:[%s7 + $0x8] sm:$0xf]
        %v1145 = vld [vmem:[%s7 + $0xc] sm:$0xf]
        %v1146 = vld [vmem:[%s7 + $0x10] sm:$0xf]
        %v1147 = vld [vmem:[%s7 + $0x14] sm:$0xf]
        %v1148 = vld [vmem:[%s7 + $0x18] sm:$0xf]
        %v1149 = vld [vmem:[%s7 + $0x1c] sm:$0xf]
        %v1158 = vunpack.c.l.b16 %v1142
        %v1159 = vunpack.c.l.b16 %v1143
        %v1160 = vunpack.c.l.b16 %v1144
        %v1161 = vunpack.c.l.b16 %v1145
        %v1162 = vunpack.c.l.b16 %v1146
        %v1163 = vunpack.c.l.b16 %v1147
        %v1164 = vunpack.c.l.b16 %v1148
        %v1165 = vunpack.c.l.b16 %v1149
        %v1166 = vpack.c.b16 %v1159, %v1158
        %v1167 = vpack.c.b16 %v1161, %v1160
        %v1168 = vpack.c.b16 %v1163, %v1162
        %v1169 = vpack.c.b16 %v1165, %v1164
        %vm1174 = vcmask 523264
        %v1176 = vsel %vm1174, %v1141, 0
        %1178 = vmatprep.subr.bf16.mxu0 0
        %1179 = vmatpush1.bf16.msra.mxu0 0
        %1180 = vmatprep.subr.bf16.mxu0 0
        %1181 = vmatpush1.bf16.msra.mxu0 0
        %1182 = vmatprep.subr.bf16.mxu0 0
        %1183 = vmatpush1.bf16.msra.mxu0 0
        %1184 = vmatprep.subr.bf16.mxu0 0
        %1185 = vmatpush1.bf16.msra.mxu0 0
        %1186 = vmatprep.subr.bf16.mxu0 0
        %1187 = vmatpush1.bf16.msra.mxu0 %v1169
        %1188 = vmatprep.subr.bf16.mxu0 0
        %1189 = vmatpush1.bf16.msra.mxu0 %v1168
        %1190 = vmatprep.subr.bf16.mxu0 0
        %1191 = vmatpush1.bf16.msra.mxu0 %v1167
        %1192 = vmatprep.subr.bf16.mxu0 0
        %1193 = vmatpush1.bf16.msra.mxu0 %v1166
        %1194 = vmatprep.subr.bf16.mxu0 0
        %1195 = vmatpush2.bf16.msra.mxu0 0
        %1196 = vmatprep.subr.bf16.mxu0 0
        %1197 = vmatpush2.bf16.msra.mxu0 0
        %1198 = vmatprep.subr.bf16.mxu0 0
        %1199 = vmatpush2.bf16.msra.mxu0 0
        %1200 = vmatprep.subr.bf16.mxu0 0
        %1201 = vmatpush2.bf16.msra.mxu0 0
        %1202 = vmatprep.subr.bf16.mxu0 0
        %1203 = vmatpush2.bf16.msra.mxu0 0
        %1204 = vmatprep.subr.bf16.mxu0 0
        %1205 = vmatpush2.bf16.msra.mxu0 0
        %1206 = vmatprep.subr.bf16.mxu0 0
        %1207 = vmatpush2.bf16.msra.mxu0 0
        %1208 = vmatprep.subr.bf16.mxu0 0
        %1209 = vmatpush2.bf16.msra.mxu0 0
        %1210 = vmatprep.mubr.bf16.mxu0 0
        %1211 = vmatmul.mubr.bf16.gmra.mxu0 %v1176
        %v1212 = vpop.f32.mrf.mxu0
        %v1213 = vadd.f32 0.0, %v1212
        %v1214 = vpop.f32.mrf.mxu0
        %v1215 = vpop.f32.mrf.mxu0
        %v1216 = vpop.f32.mrf.mxu0
        %1217 = vdwg.mxu0
        %v1218 = vadd.f32 %v1055, %v1213
        %s1219 = scalar_lea.vmem %s2, 1
        %v1220 = vld [vmem:[%s1219] sm:$0x1]
        %v1221 = vmul.f32 %v1218, %v1218
        %v1222 = vsel %vm456, %v1221, 0.0
        %1223 = vadd.xlane.f32.xlu0 %v1222
        %v1224 = vpop.xlane.xlu0 %1223
        %v1225 = vmul.f32 %v1224, %v460
        %v1226 = vadd.f32 %v1225, 1e-06
        %v1227 = vrsqrt.pop %v1226
        %v1228 = vmul.f32 %v1218, %v1227
        %v1230 = vlaneseq
        %v1231 = vshrl.u32 %v1230, 7
        %v1232 = vsub.s32 0, %v1231
        %v1233 = vrot.slane %v1220, %v1232
        %v1235 = vmul.f32 %v1228, %v1233
        %v1236 = vpack.c.bf16 %v1235, %v1235
        %s1237 = scalar_lea.vmem %s3, 16
        %v1238 = vld [vmem:[%s1237] sm:$0xf]
        %v1239 = vld [vmem:[%s1237 + $0x4] sm:$0xf]
        %v1240 = vld [vmem:[%s1237 + $0x8] sm:$0xf]
        %v1241 = vld [vmem:[%s1237 + $0xc] sm:$0xf]
        %v1246 = vunpack.c.l.b16 %v1238
        %v1247 = vunpack.c.l.b16 %v1239
        %v1248 = vunpack.c.l.b16 %v1240
        %v1249 = vunpack.c.l.b16 %v1241
        %v1250 = vpack.c.b16 %v1247, %v1246
        %v1251 = vpack.c.b16 %v1249, %v1248
        %v1255 = vsel %vm456, %v1236, 0
        %1257 = vmatprep.subr.bf16.mxu0 0
        %1258 = vmatpush1.bf16.msra.mxu0 0
        %1259 = vmatprep.subr.bf16.mxu0 0
        %1260 = vmatpush1.bf16.msra.mxu0 0
        %1261 = vmatprep.subr.bf16.mxu0 0
        %1262 = vmatpush1.bf16.msra.mxu0 0
        %1263 = vmatprep.subr.bf16.mxu0 0
        %1264 = vmatpush1.bf16.msra.mxu0 0
        %1265 = vmatprep.subr.bf16.mxu0 0
        %1266 = vmatpush1.bf16.msra.mxu0 0
        %1267 = vmatprep.subr.bf16.mxu0 0
        %1268 = vmatpush1.bf16.msra.mxu0 0
        %1269 = vmatprep.subr.bf16.mxu0 0
        %1270 = vmatpush1.bf16.msra.mxu0 %v1251
        %1271 = vmatprep.subr.bf16.mxu0 0
        %1272 = vmatpush1.bf16.msra.mxu0 %v1250
        %1273 = vmatprep.subr.bf16.mxu0 0
        %1274 = vmatpush2.bf16.msra.mxu0 0
        %1275 = vmatprep.subr.bf16.mxu0 0
        %1276 = vmatpush2.bf16.msra.mxu0 0
        %1277 = vmatprep.subr.bf16.mxu0 0
        %1278 = vmatpush2.bf16.msra.mxu0 0
        %1279 = vmatprep.subr.bf16.mxu0 0
        %1280 = vmatpush2.bf16.msra.mxu0 0
        %1281 = vmatprep.subr.bf16.mxu0 0
        %1282 = vmatpush2.bf16.msra.mxu0 0
        %1283 = vmatprep.subr.bf16.mxu0 0
        %1284 = vmatpush2.bf16.msra.mxu0 0
        %1285 = vmatprep.subr.bf16.mxu0 0
        %1286 = vmatpush2.bf16.msra.mxu0 0
        %1287 = vmatprep.subr.bf16.mxu0 0
        %1288 = vmatpush2.bf16.msra.mxu0 0
        %1289 = vmatprep.mubr.bf16.mxu0 0
        %1290 = vmatmul.mubr.bf16.gmra.mxu0 %v1255
        %v1291 = vpop.f32.mrf.mxu0
        %v1292 = vadd.f32 0.0, %v1291
        %v1293 = vpop.f32.mrf.mxu0
        %v1294 = vpop.f32.mrf.mxu0
        %v1295 = vpop.f32.mrf.mxu0
        %1296 = vdwg.mxu0
        %v1297 = vpack.c.bf16 %v1292, %v1292
        %1299 = vrot.lane.b32.xlu0 %v1297, 96
        %v1300 = vpop.permute.xlu0 %1299
        %v1302 = vsel %vm536, %v1297, 0
        %v1305 = vsel %vm536, %v1300, 0
        %1307 = vmatprep.subr.bf16.mxu0 0
        %1308 = vmatpush1.bf16.xpose.msra.mxu0 0
        %1309 = vmatprep.subr.bf16.mxu0 0
        %1310 = vmatpush1.bf16.xpose.msra.mxu0 0
        %1311 = vmatprep.subr.bf16.mxu0 0
        %1312 = vmatpush1.bf16.xpose.msra.mxu0 0
        %1313 = vmatprep.subr.bf16.mxu0 0
        %1314 = vmatpush1.bf16.xpose.msra.mxu0 0
        %1315 = vmatprep.subr.bf16.mxu0 0
        %1316 = vmatpush1.bf16.xpose.msra.mxu0 0
        %1317 = vmatprep.subr.bf16.mxu0 0
        %1318 = vmatpush1.bf16.xpose.msra.mxu0 0
        %1319 = vmatprep.subr.bf16.mxu0 0
        %1320 = vmatpush1.bf16.xpose.msra.mxu0 0
        %1321 = vmatprep.subr.bf16.mxu0 0
        %1322 = vmatpush1.bf16.xpose.msra.mxu0 %v1305
        %1323 = vmatprep.subr.bf16.mxu0 0
        %1324 = vmatpush2.bf16.xpose.msra.mxu0 0
        %1325 = vmatprep.subr.bf16.mxu0 0
        %1326 = vmatpush2.bf16.xpose.msra.mxu0 0
        %1327 = vmatprep.subr.bf16.mxu0 0
        %1328 = vmatpush2.bf16.xpose.msra.mxu0 0
        %1329 = vmatprep.subr.bf16.mxu0 0
        %1330 = vmatpush2.bf16.xpose.msra.mxu0 0
        %1331 = vmatprep.subr.bf16.mxu0 0
        %1332 = vmatpush2.bf16.xpose.msra.mxu0 0
        %1333 = vmatprep.subr.bf16.mxu0 0
        %1334 = vmatpush2.bf16.xpose.msra.mxu0 0
        %1335 = vmatprep.subr.bf16.mxu0 0
        %1336 = vmatpush2.bf16.xpose.msra.mxu0 0
        %1337 = vmatprep.subr.bf16.mxu0 0
        %1338 = vmatpush2.bf16.xpose.msra.mxu0 0
        %1339 = vmatprep.mubr.bf16.mxu0 0
        %1340 = vmatmul.mubr.bf16.gmra.mxu0 %v1302
        %v1341 = vpop.f32.mrf.mxu0
        %v1342 = vadd.f32 0.0, %v1341
        %v1343 = vpop.f32.mrf.mxu0
        %v1344 = vpop.f32.mrf.mxu0
        %v1345 = vpop.f32.mrf.mxu0
        %1346 = vdwg.mxu0
        %v1347 = vsel %vm453, %v1342, -1e+30
        %v1348 = vsel %vm536, %v1347, -inf
        %1349 = vmax.xlane.f32.xlu0 %v1348
        %v1350 = vpop.xlane.xlu0 %1349
        %v1351 = vsub.f32 %v1347, %v1350
        %v1352 = vmul.f32 %v1351, 1.442695
        %v1353 = vpow.pop %v1352
        %v1354 = vsel %vm536, %v1353, 0.0
        %1355 = vadd.xlane.f32.xlu0 %v1354
        %v1356 = vpop.xlane.xlu0 %1355
        %v1357 = vrcp.pop %v1356
        %v1358 = vmul.f32 %v1353, %v1357
        %v1359 = vpack.c.bf16 %v1358, %v1358
        %1360 = vrot.lane.b32.xlu0 %v1297, 64
        %v1361 = vpop.permute.xlu0 %1360
        %v1363 = vsel %vm536, %v1359, 0
        %v1366 = vsel %vm601, %v1361, 0
        %1368 = vmatprep.subr.bf16.mxu0 0
        %1369 = vmatpush1.bf16.msra.mxu0 0
        %1370 = vmatprep.subr.bf16.mxu0 0
        %1371 = vmatpush1.bf16.msra.mxu0 0
        %1372 = vmatprep.subr.bf16.mxu0 0
        %1373 = vmatpush1.bf16.msra.mxu0 0
        %1374 = vmatprep.subr.bf16.mxu0 0
        %1375 = vmatpush1.bf16.msra.mxu0 0
        %1376 = vmatprep.subr.bf16.mxu0 0
        %1377 = vmatpush1.bf16.msra.mxu0 0
        %1378 = vmatprep.subr.bf16.mxu0 0
        %1379 = vmatpush1.bf16.msra.mxu0 0
        %1380 = vmatprep.subr.bf16.mxu0 0
        %1381 = vmatpush1.bf16.msra.mxu0 0
        %1382 = vmatprep.subr.bf16.mxu0 0
        %1383 = vmatpush1.bf16.msra.mxu0 %v1366
        %1384 = vmatprep.subr.bf16.mxu0 0
        %1385 = vmatpush2.bf16.msra.mxu0 0
        %1386 = vmatprep.subr.bf16.mxu0 0
        %1387 = vmatpush2.bf16.msra.mxu0 0
        %1388 = vmatprep.subr.bf16.mxu0 0
        %1389 = vmatpush2.bf16.msra.mxu0 0
        %1390 = vmatprep.subr.bf16.mxu0 0
        %1391 = vmatpush2.bf16.msra.mxu0 0
        %1392 = vmatprep.subr.bf16.mxu0 0
        %1393 = vmatpush2.bf16.msra.mxu0 0
        %1394 = vmatprep.subr.bf16.mxu0 0
        %1395 = vmatpush2.bf16.msra.mxu0 0
        %1396 = vmatprep.subr.bf16.mxu0 0
        %1397 = vmatpush2.bf16.msra.mxu0 0
        %1398 = vmatprep.subr.bf16.mxu0 0
        %1399 = vmatpush2.bf16.msra.mxu0 0
        %1400 = vmatprep.mubr.bf16.mxu0 0
        %1401 = vmatmul.mubr.bf16.gmra.mxu0 %v1363
        %v1402 = vpop.f32.mrf.mxu0
        %v1403 = vadd.f32 0.0, %v1402
        %v1404 = vpop.f32.mrf.mxu0
        %v1405 = vpop.f32.mrf.mxu0
        %v1406 = vpop.f32.mrf.mxu0
        %1407 = vdwg.mxu0
        %1408 = vrot.lane.b32.xlu0 %v1297, 120
        %v1409 = vpop.permute.xlu0 %1408
        %1410 = vrot.lane.b32.xlu0 %v1297, 88
        %v1411 = vpop.permute.xlu0 %1410
        %v1413 = vsel %vm536, %v1409, 0
        %v1416 = vsel %vm536, %v1411, 0
        %1418 = vmatprep.subr.bf16.mxu0 0
        %1419 = vmatpush1.bf16.xpose.msra.mxu0 0
        %1420 = vmatprep.subr.bf16.mxu0 0
        %1421 = vmatpush1.bf16.xpose.msra.mxu0 0
        %1422 = vmatprep.subr.bf16.mxu0 0
        %1423 = vmatpush1.bf16.xpose.msra.mxu0 0
        %1424 = vmatprep.subr.bf16.mxu0 0
        %1425 = vmatpush1.bf16.xpose.msra.mxu0 0
        %1426 = vmatprep.subr.bf16.mxu0 0
        %1427 = vmatpush1.bf16.xpose.msra.mxu0 0
        %1428 = vmatprep.subr.bf16.mxu0 0
        %1429 = vmatpush1.bf16.xpose.msra.mxu0 0
        %1430 = vmatprep.subr.bf16.mxu0 0
        %1431 = vmatpush1.bf16.xpose.msra.mxu0 0
        %1432 = vmatprep.subr.bf16.mxu0 0
        %1433 = vmatpush1.bf16.xpose.msra.mxu0 %v1416
        %1434 = vmatprep.subr.bf16.mxu0 0
        %1435 = vmatpush2.bf16.xpose.msra.mxu0 0
        %1436 = vmatprep.subr.bf16.mxu0 0
        %1437 = vmatpush2.bf16.xpose.msra.mxu0 0
        %1438 = vmatprep.subr.bf16.mxu0 0
        %1439 = vmatpush2.bf16.xpose.msra.mxu0 0
        %1440 = vmatprep.subr.bf16.mxu0 0
        %1441 = vmatpush2.bf16.xpose.msra.mxu0 0
        %1442 = vmatprep.subr.bf16.mxu0 0
        %1443 = vmatpush2.bf16.xpose.msra.mxu0 0
        %1444 = vmatprep.subr.bf16.mxu0 0
        %1445 = vmatpush2.bf16.xpose.msra.mxu0 0
        %1446 = vmatprep.subr.bf16.mxu0 0
        %1447 = vmatpush2.bf16.xpose.msra.mxu0 0
        %1448 = vmatprep.subr.bf16.mxu0 0
        %1449 = vmatpush2.bf16.xpose.msra.mxu0 0
        %1450 = vmatprep.mubr.bf16.mxu0 0
        %1451 = vmatmul.mubr.bf16.gmra.mxu0 %v1413
        %v1452 = vpop.f32.mrf.mxu0
        %v1453 = vadd.f32 0.0, %v1452
        %v1454 = vpop.f32.mrf.mxu0
        %v1455 = vpop.f32.mrf.mxu0
        %v1456 = vpop.f32.mrf.mxu0
        %1457 = vdwg.mxu0
        %v1458 = vsel %vm453, %v1453, -1e+30
        %v1459 = vsel %vm536, %v1458, -inf
        %1460 = vmax.xlane.f32.xlu0 %v1459
        %v1461 = vpop.xlane.xlu0 %1460
        %v1462 = vsub.f32 %v1458, %v1461
        %v1463 = vmul.f32 %v1462, 1.442695
        %v1464 = vpow.pop %v1463
        %v1465 = vsel %vm536, %v1464, 0.0
        %1466 = vadd.xlane.f32.xlu0 %v1465
        %v1467 = vpop.xlane.xlu0 %1466
        %v1468 = vrcp.pop %v1467
        %v1469 = vmul.f32 %v1464, %v1468
        %v1470 = vpack.c.bf16 %v1469, %v1469
        %1471 = vrot.lane.b32.xlu0 %v1297, 56
        %v1472 = vpop.permute.xlu0 %1471
        %v1474 = vsel %vm536, %v1470, 0
        %v1477 = vsel %vm601, %v1472, 0
        %1479 = vmatprep.subr.bf16.mxu0 0
        %1480 = vmatpush1.bf16.msra.mxu0 0
        %1481 = vmatprep.subr.bf16.mxu0 0
        %1482 = vmatpush1.bf16.msra.mxu0 0
        %1483 = vmatprep.subr.bf16.mxu0 0
        %1484 = vmatpush1.bf16.msra.mxu0 0
        %1485 = vmatprep.subr.bf16.mxu0 0
        %1486 = vmatpush1.bf16.msra.mxu0 0
        %1487 = vmatprep.subr.bf16.mxu0 0
        %1488 = vmatpush1.bf16.msra.mxu0 0
        %1489 = vmatprep.subr.bf16.mxu0 0
        %1490 = vmatpush1.bf16.msra.mxu0 0
        %1491 = vmatprep.subr.bf16.mxu0 0
        %1492 = vmatpush1.bf16.msra.mxu0 0
        %1493 = vmatprep.subr.bf16.mxu0 0
        %1494 = vmatpush1.bf16.msra.mxu0 %v1477
        %1495 = vmatprep.subr.bf16.mxu0 0
        %1496 = vmatpush2.bf16.msra.mxu0 0
        %1497 = vmatprep.subr.bf16.mxu0 0
        %1498 = vmatpush2.bf16.msra.mxu0 0
        %1499 = vmatprep.subr.bf16.mxu0 0
        %1500 = vmatpush2.bf16.msra.mxu0 0
        %1501 = vmatprep.subr.bf16.mxu0 0
        %1502 = vmatpush2.bf16.msra.mxu0 0
        %1503 = vmatprep.subr.bf16.mxu0 0
        %1504 = vmatpush2.bf16.msra.mxu0 0
        %1505 = vmatprep.subr.bf16.mxu0 0
        %1506 = vmatpush2.bf16.msra.mxu0 0
        %1507 = vmatprep.subr.bf16.mxu0 0
        %1508 = vmatpush2.bf16.msra.mxu0 0
        %1509 = vmatprep.subr.bf16.mxu0 0
        %1510 = vmatpush2.bf16.msra.mxu0 0
        %1511 = vmatprep.mubr.bf16.mxu0 0
        %1512 = vmatmul.mubr.bf16.gmra.mxu0 %v1474
        %v1513 = vpop.f32.mrf.mxu0
        %v1514 = vadd.f32 0.0, %v1513
        %v1515 = vpop.f32.mrf.mxu0
        %v1516 = vpop.f32.mrf.mxu0
        %v1517 = vpop.f32.mrf.mxu0
        %1518 = vdwg.mxu0
        %1519 = vrot.lane.b32.xlu0 %v1297, 112
        %v1520 = vpop.permute.xlu0 %1519
        %1521 = vrot.lane.b32.xlu0 %v1297, 80
        %v1522 = vpop.permute.xlu0 %1521
        %v1524 = vsel %vm536, %v1520, 0
        %v1527 = vsel %vm536, %v1522, 0
        %1529 = vmatprep.subr.bf16.mxu0 0
        %1530 = vmatpush1.bf16.xpose.msra.mxu0 0
        %1531 = vmatprep.subr.bf16.mxu0 0
        %1532 = vmatpush1.bf16.xpose.msra.mxu0 0
        %1533 = vmatprep.subr.bf16.mxu0 0
        %1534 = vmatpush1.bf16.xpose.msra.mxu0 0
        %1535 = vmatprep.subr.bf16.mxu0 0
        %1536 = vmatpush1.bf16.xpose.msra.mxu0 0
        %1537 = vmatprep.subr.bf16.mxu0 0
        %1538 = vmatpush1.bf16.xpose.msra.mxu0 0
        %1539 = vmatprep.subr.bf16.mxu0 0
        %1540 = vmatpush1.bf16.xpose.msra.mxu0 0
        %1541 = vmatprep.subr.bf16.mxu0 0
        %1542 = vmatpush1.bf16.xpose.msra.mxu0 0
        %1543 = vmatprep.subr.bf16.mxu0 0
        %1544 = vmatpush1.bf16.xpose.msra.mxu0 %v1527
        %1545 = vmatprep.subr.bf16.mxu0 0
        %1546 = vmatpush2.bf16.xpose.msra.mxu0 0
        %1547 = vmatprep.subr.bf16.mxu0 0
        %1548 = vmatpush2.bf16.xpose.msra.mxu0 0
        %1549 = vmatprep.subr.bf16.mxu0 0
        %1550 = vmatpush2.bf16.xpose.msra.mxu0 0
        %1551 = vmatprep.subr.bf16.mxu0 0
        %1552 = vmatpush2.bf16.xpose.msra.mxu0 0
        %1553 = vmatprep.subr.bf16.mxu0 0
        %1554 = vmatpush2.bf16.xpose.msra.mxu0 0
        %1555 = vmatprep.subr.bf16.mxu0 0
        %1556 = vmatpush2.bf16.xpose.msra.mxu0 0
        %1557 = vmatprep.subr.bf16.mxu0 0
        %1558 = vmatpush2.bf16.xpose.msra.mxu0 0
        %1559 = vmatprep.subr.bf16.mxu0 0
        %1560 = vmatpush2.bf16.xpose.msra.mxu0 0
        %1561 = vmatprep.mubr.bf16.mxu0 0
        %1562 = vmatmul.mubr.bf16.gmra.mxu0 %v1524
        %v1563 = vpop.f32.mrf.mxu0
        %v1564 = vadd.f32 0.0, %v1563
        %v1565 = vpop.f32.mrf.mxu0
        %v1566 = vpop.f32.mrf.mxu0
        %v1567 = vpop.f32.mrf.mxu0
        %1568 = vdwg.mxu0
        %v1569 = vsel %vm453, %v1564, -1e+30
        %v1570 = vsel %vm536, %v1569, -inf
        %1571 = vmax.xlane.f32.xlu0 %v1570
        %v1572 = vpop.xlane.xlu0 %1571
        %v1573 = vsub.f32 %v1569, %v1572
        %v1574 = vmul.f32 %v1573, 1.442695
        %v1575 = vpow.pop %v1574
        %v1576 = vsel %vm536, %v1575, 0.0
        %1577 = vadd.xlane.f32.xlu0 %v1576
        %v1578 = vpop.xlane.xlu0 %1577
        %v1579 = vrcp.pop %v1578
        %v1580 = vmul.f32 %v1575, %v1579
        %v1581 = vpack.c.bf16 %v1580, %v1580
        %1582 = vrot.lane.b32.xlu0 %v1297, 48
        %v1583 = vpop.permute.xlu0 %1582
        %v1585 = vsel %vm536, %v1581, 0
        %v1588 = vsel %vm601, %v1583, 0
        %1590 = vmatprep.subr.bf16.mxu0 0
        %1591 = vmatpush1.bf16.msra.mxu0 0
        %1592 = vmatprep.subr.bf16.mxu0 0
        %1593 = vmatpush1.bf16.msra.mxu0 0
        %1594 = vmatprep.subr.bf16.mxu0 0
        %1595 = vmatpush1.bf16.msra.mxu0 0
        %1596 = vmatprep.subr.bf16.mxu0 0
        %1597 = vmatpush1.bf16.msra.mxu0 0
        %1598 = vmatprep.subr.bf16.mxu0 0
        %1599 = vmatpush1.bf16.msra.mxu0 0
        %1600 = vmatprep.subr.bf16.mxu0 0
        %1601 = vmatpush1.bf16.msra.mxu0 0
        %1602 = vmatprep.subr.bf16.mxu0 0
        %1603 = vmatpush1.bf16.msra.mxu0 0
        %1604 = vmatprep.subr.bf16.mxu0 0
        %1605 = vmatpush1.bf16.msra.mxu0 %v1588
        %1606 = vmatprep.subr.bf16.mxu0 0
        %1607 = vmatpush2.bf16.msra.mxu0 0
        %1608 = vmatprep.subr.bf16.mxu0 0
        %1609 = vmatpush2.bf16.msra.mxu0 0
        %1610 = vmatprep.subr.bf16.mxu0 0
        %1611 = vmatpush2.bf16.msra.mxu0 0
        %1612 = vmatprep.subr.bf16.mxu0 0
        %1613 = vmatpush2.bf16.msra.mxu0 0
        %1614 = vmatprep.subr.bf16.mxu0 0
        %1615 = vmatpush2.bf16.msra.mxu0 0
        %1616 = vmatprep.subr.bf16.mxu0 0
        %1617 = vmatpush2.bf16.msra.mxu0 0
        %1618 = vmatprep.subr.bf16.mxu0 0
        %1619 = vmatpush2.bf16.msra.mxu0 0
        %1620 = vmatprep.subr.bf16.mxu0 0
        %1621 = vmatpush2.bf16.msra.mxu0 0
        %1622 = vmatprep.mubr.bf16.mxu0 0
        %1623 = vmatmul.mubr.bf16.gmra.mxu0 %v1585
        %v1624 = vpop.f32.mrf.mxu0
        %v1625 = vadd.f32 0.0, %v1624
        %v1626 = vpop.f32.mrf.mxu0
        %v1627 = vpop.f32.mrf.mxu0
        %v1628 = vpop.f32.mrf.mxu0
        %1629 = vdwg.mxu0
        %1630 = vrot.lane.b32.xlu0 %v1297, 104
        %v1631 = vpop.permute.xlu0 %1630
        %1632 = vrot.lane.b32.xlu0 %v1297, 72
        %v1633 = vpop.permute.xlu0 %1632
        %v1635 = vsel %vm536, %v1631, 0
        %v1638 = vsel %vm536, %v1633, 0
        %1640 = vmatprep.subr.bf16.mxu0 0
        %1641 = vmatpush1.bf16.xpose.msra.mxu0 0
        %1642 = vmatprep.subr.bf16.mxu0 0
        %1643 = vmatpush1.bf16.xpose.msra.mxu0 0
        %1644 = vmatprep.subr.bf16.mxu0 0
        %1645 = vmatpush1.bf16.xpose.msra.mxu0 0
        %1646 = vmatprep.subr.bf16.mxu0 0
        %1647 = vmatpush1.bf16.xpose.msra.mxu0 0
        %1648 = vmatprep.subr.bf16.mxu0 0
        %1649 = vmatpush1.bf16.xpose.msra.mxu0 0
        %1650 = vmatprep.subr.bf16.mxu0 0
        %1651 = vmatpush1.bf16.xpose.msra.mxu0 0
        %1652 = vmatprep.subr.bf16.mxu0 0
        %1653 = vmatpush1.bf16.xpose.msra.mxu0 0
        %1654 = vmatprep.subr.bf16.mxu0 0
        %1655 = vmatpush1.bf16.xpose.msra.mxu0 %v1638
        %1656 = vmatprep.subr.bf16.mxu0 0
        %1657 = vmatpush2.bf16.xpose.msra.mxu0 0
        %1658 = vmatprep.subr.bf16.mxu0 0
        %1659 = vmatpush2.bf16.xpose.msra.mxu0 0
        %1660 = vmatprep.subr.bf16.mxu0 0
        %1661 = vmatpush2.bf16.xpose.msra.mxu0 0
        %1662 = vmatprep.subr.bf16.mxu0 0
        %1663 = vmatpush2.bf16.xpose.msra.mxu0 0
        %1664 = vmatprep.subr.bf16.mxu0 0
        %1665 = vmatpush2.bf16.xpose.msra.mxu0 0
        %1666 = vmatprep.subr.bf16.mxu0 0
        %1667 = vmatpush2.bf16.xpose.msra.mxu0 0
        %1668 = vmatprep.subr.bf16.mxu0 0
        %1669 = vmatpush2.bf16.xpose.msra.mxu0 0
        %1670 = vmatprep.subr.bf16.mxu0 0
        %1671 = vmatpush2.bf16.xpose.msra.mxu0 0
        %1672 = vmatprep.mubr.bf16.mxu0 0
        %1673 = vmatmul.mubr.bf16.gmra.mxu0 %v1635
        %v1674 = vpop.f32.mrf.mxu0
        %v1675 = vadd.f32 0.0, %v1674
        %v1676 = vpop.f32.mrf.mxu0
        %v1677 = vpop.f32.mrf.mxu0
        %v1678 = vpop.f32.mrf.mxu0
        %1679 = vdwg.mxu0
        %v1680 = vsel %vm453, %v1675, -1e+30
        %v1681 = vsel %vm536, %v1680, -inf
        %1682 = vmax.xlane.f32.xlu0 %v1681
        %v1683 = vpop.xlane.xlu0 %1682
        %v1684 = vsub.f32 %v1680, %v1683
        %v1685 = vmul.f32 %v1684, 1.442695
        %v1686 = vpow.pop %v1685
        %v1687 = vsel %vm536, %v1686, 0.0
        %1688 = vadd.xlane.f32.xlu0 %v1687
        %v1689 = vpop.xlane.xlu0 %1688
        %v1690 = vrcp.pop %v1689
        %v1691 = vmul.f32 %v1686, %v1690
        %v1692 = vpack.c.bf16 %v1691, %v1691
        %1693 = vrot.lane.b32.xlu0 %v1297, 40
        %v1694 = vpop.permute.xlu0 %1693
        %v1696 = vsel %vm536, %v1692, 0
        %v1699 = vsel %vm601, %v1694, 0
        %1701 = vmatprep.subr.bf16.mxu0 0
        %1702 = vmatpush1.bf16.msra.mxu0 0
        %1703 = vmatprep.subr.bf16.mxu0 0
        %1704 = vmatpush1.bf16.msra.mxu0 0
        %1705 = vmatprep.subr.bf16.mxu0 0
        %1706 = vmatpush1.bf16.msra.mxu0 0
        %1707 = vmatprep.subr.bf16.mxu0 0
        %1708 = vmatpush1.bf16.msra.mxu0 0
        %1709 = vmatprep.subr.bf16.mxu0 0
        %1710 = vmatpush1.bf16.msra.mxu0 0
        %1711 = vmatprep.subr.bf16.mxu0 0
        %1712 = vmatpush1.bf16.msra.mxu0 0
        %1713 = vmatprep.subr.bf16.mxu0 0
        %1714 = vmatpush1.bf16.msra.mxu0 0
        %1715 = vmatprep.subr.bf16.mxu0 0
        %1716 = vmatpush1.bf16.msra.mxu0 %v1699
        %1717 = vmatprep.subr.bf16.mxu0 0
        %1718 = vmatpush2.bf16.msra.mxu0 0
        %1719 = vmatprep.subr.bf16.mxu0 0
        %1720 = vmatpush2.bf16.msra.mxu0 0
        %1721 = vmatprep.subr.bf16.mxu0 0
        %1722 = vmatpush2.bf16.msra.mxu0 0
        %1723 = vmatprep.subr.bf16.mxu0 0
        %1724 = vmatpush2.bf16.msra.mxu0 0
        %1725 = vmatprep.subr.bf16.mxu0 0
        %1726 = vmatpush2.bf16.msra.mxu0 0
        %1727 = vmatprep.subr.bf16.mxu0 0
        %1728 = vmatpush2.bf16.msra.mxu0 0
        %1729 = vmatprep.subr.bf16.mxu0 0
        %1730 = vmatpush2.bf16.msra.mxu0 0
        %1731 = vmatprep.subr.bf16.mxu0 0
        %1732 = vmatpush2.bf16.msra.mxu0 0
        %1733 = vmatprep.mubr.bf16.mxu0 0
        %1734 = vmatmul.mubr.bf16.gmra.mxu0 %v1696
        %v1735 = vpop.f32.mrf.mxu0
        %v1736 = vadd.f32 0.0, %v1735
        %v1737 = vpop.f32.mrf.mxu0
        %v1738 = vpop.f32.mrf.mxu0
        %v1739 = vpop.f32.mrf.mxu0
        %1740 = vdwg.mxu0
        %1742 = vrot.lane.b32.xlu0 %v1514, 8
        %v1743 = vpop.permute.xlu0 %1742
        %1746 = vrot.lane.b32.xlu0 %v1625, 16
        %v1747 = vpop.permute.xlu0 %1746
        %1750 = vrot.lane.b32.xlu0 %v1736, 24
        %v1751 = vpop.permute.xlu0 %1750
        %v1753 = vsel %vm536, %v1403, %v1743
        %v1754 = vsel %vm991, %v1753, %v1747
        %v1755 = vsel %vm993, %v1754, %v1751
        %v1756 = vpack.c.bf16 %v1755, %v1755
        %s1757 = scalar_lea.vmem %s4, 16
        %v1758 = vld [vmem:[%s1757] sm:$0xf]
        %v1759 = vld [vmem:[%s1757 + $0x4] sm:$0xf]
        %v1760 = vld [vmem:[%s1757 + $0x8] sm:$0xf]
        %v1761 = vld [vmem:[%s1757 + $0xc] sm:$0xf]
        %v1766 = vunpack.c.l.b16 %v1758
        %v1767 = vunpack.c.l.b16 %v1759
        %v1768 = vunpack.c.l.b16 %v1760
        %v1769 = vunpack.c.l.b16 %v1761
        %v1770 = vpack.c.b16 %v1767, %v1766
        %v1771 = vpack.c.b16 %v1769, %v1768
        %v1775 = vsel %vm456, %v1756, 0
        %1777 = vmatprep.subr.bf16.mxu0 0
        %1778 = vmatpush1.bf16.msra.mxu0 0
        %1779 = vmatprep.subr.bf16.mxu0 0
        %1780 = vmatpush1.bf16.msra.mxu0 0
        %1781 = vmatprep.subr.bf16.mxu0 0
        %1782 = vmatpush1.bf16.msra.mxu0 0
        %1783 = vmatprep.subr.bf16.mxu0 0
        %1784 = vmatpush1.bf16.msra.mxu0 0
        %1785 = vmatprep.subr.bf16.mxu0 0
        %1786 = vmatpush1.bf16.msra.mxu0 0
        %1787 = vmatprep.subr.bf16.mxu0 0
        %1788 = vmatpush1.bf16.msra.mxu0 0
        %1789 = vmatprep.subr.bf16.mxu0 0
        %1790 = vmatpush1.bf16.msra.mxu0 %v1771
        %1791 = vmatprep.subr.bf16.mxu0 0
        %1792 = vmatpush1.bf16.msra.mxu0 %v1770
        %1793 = vmatprep.subr.bf16.mxu0 0
        %1794 = vmatpush2.bf16.msra.mxu0 0
        %1795 = vmatprep.subr.bf16.mxu0 0
        %1796 = vmatpush2.bf16.msra.mxu0 0
        %1797 = vmatprep.subr.bf16.mxu0 0
        %1798 = vmatpush2.bf16.msra.mxu0 0
        %1799 = vmatprep.subr.bf16.mxu0 0
        %1800 = vmatpush2.bf16.msra.mxu0 0
        %1801 = vmatprep.subr.bf16.mxu0 0
        %1802 = vmatpush2.bf16.msra.mxu0 0
        %1803 = vmatprep.subr.bf16.mxu0 0
        %1804 = vmatpush2.bf16.msra.mxu0 0
        %1805 = vmatprep.subr.bf16.mxu0 0
        %1806 = vmatpush2.bf16.msra.mxu0 0
        %1807 = vmatprep.subr.bf16.mxu0 0
        %1808 = vmatpush2.bf16.msra.mxu0 0
        %1809 = vmatprep.mubr.bf16.mxu0 0
        %1810 = vmatmul.mubr.bf16.gmra.mxu0 %v1775
        %v1811 = vpop.f32.mrf.mxu0
        %v1812 = vadd.f32 0.0, %v1811
        %v1813 = vpop.f32.mrf.mxu0
        %v1814 = vpop.f32.mrf.mxu0
        %v1815 = vpop.f32.mrf.mxu0
        %1816 = vdwg.mxu0
        %v1817 = vadd.f32 %v1218, %v1812
        %s1818 = scalar_lea.vmem %s5, 1
        %v1819 = vld [vmem:[%s1818] sm:$0x1]
        %v1820 = vmul.f32 %v1817, %v1817
        %v1821 = vsel %vm456, %v1820, 0.0
        %1822 = vadd.xlane.f32.xlu0 %v1821
        %v1823 = vpop.xlane.xlu0 %1822
        %v1824 = vmul.f32 %v1823, %v460
        %v1825 = vadd.f32 %v1824, 1e-06
        %v1826 = vrsqrt.pop %v1825
        %v1827 = vmul.f32 %v1817, %v1826
        %v1829 = vlaneseq
        %v1830 = vshrl.u32 %v1829, 7
        %v1831 = vsub.s32 0, %v1830
        %v1832 = vrot.slane %v1819, %v1831
        %v1834 = vmul.f32 %v1827, %v1832
        %v1835 = vpack.c.bf16 %v1834, %v1834
        %s1836 = scalar_lea.vmem %s6, 16
        %v1837 = vld [vmem:[%s1836] sm:$0xf]
        %v1838 = vld [vmem:[%s1836 + $0x4] sm:$0xf]
        %v1839 = vld [vmem:[%s1836 + $0x8] sm:$0xf]
        %v1840 = vld [vmem:[%s1836 + $0xc] sm:$0xf]
        %v1845 = vunpack.c.l.b16 %v1837
        %v1846 = vunpack.c.l.b16 %v1838
        %v1847 = vunpack.c.l.b16 %v1839
        %v1848 = vunpack.c.l.b16 %v1840
        %v1849 = vpack.c.b16 %v1846, %v1845
        %v1850 = vpack.c.b16 %v1848, %v1847
        %v1854 = vsel %vm456, %v1835, 0
        %1856 = vmatprep.subr.bf16.mxu0 0
        %1857 = vmatpush1.bf16.msra.mxu0 0
        %1858 = vmatprep.subr.bf16.mxu0 0
        %1859 = vmatpush1.bf16.msra.mxu0 0
        %1860 = vmatprep.subr.bf16.mxu0 0
        %1861 = vmatpush1.bf16.msra.mxu0 0
        %1862 = vmatprep.subr.bf16.mxu0 0
        %1863 = vmatpush1.bf16.msra.mxu0 0
        %1864 = vmatprep.subr.bf16.mxu0 0
        %1865 = vmatpush1.bf16.msra.mxu0 0
        %1866 = vmatprep.subr.bf16.mxu0 0
        %1867 = vmatpush1.bf16.msra.mxu0 0
        %1868 = vmatprep.subr.bf16.mxu0 0
        %1869 = vmatpush1.bf16.msra.mxu0 %v1850
        %1870 = vmatprep.subr.bf16.mxu0 0
        %1871 = vmatpush1.bf16.msra.mxu0 %v1849
        %1872 = vmatprep.subr.bf16.mxu0 0
        %1873 = vmatpush2.bf16.msra.mxu0 0
        %1874 = vmatprep.subr.bf16.mxu0 0
        %1875 = vmatpush2.bf16.msra.mxu0 0
        %1876 = vmatprep.subr.bf16.mxu0 0
        %1877 = vmatpush2.bf16.msra.mxu0 0
        %1878 = vmatprep.subr.bf16.mxu0 0
        %1879 = vmatpush2.bf16.msra.mxu0 0
        %1880 = vmatprep.subr.bf16.mxu0 0
        %1881 = vmatpush2.bf16.msra.mxu0 0
        %1882 = vmatprep.subr.bf16.mxu0 0
        %1883 = vmatpush2.bf16.msra.mxu0 0
        %1884 = vmatprep.subr.bf16.mxu0 0
        %1885 = vmatpush2.bf16.msra.mxu0 0
        %1886 = vmatprep.subr.bf16.mxu0 0
        %1887 = vmatpush2.bf16.msra.mxu0 0
        %1888 = vmatprep.mubr.bf16.mxu0 0
        %1889 = vmatmul.mubr.bf16.gmra.mxu0 %v1854
        %v1890 = vpop.f32.mrf.mxu0
        %v1891 = vadd.f32 0.0, %v1890
        %v1892 = vpop.f32.mrf.mxu0
        %v1893 = vpop.f32.mrf.mxu0
        %v1894 = vpop.f32.mrf.mxu0
        %1895 = vdwg.mxu0
        %v1896 = vmul.f32 %v1891, %v1891
        %v1897 = vmul.f32 %v1891, %v1896
        %v1898 = vmul.f32 %v1897, 0.044715
        %v1899 = vadd.f32 %v1891, %v1898
        %v1900 = vmul.f32 %v1899, 0.7978846
        %v1901 = vtanh.pop %v1900
        %v1902 = vadd.f32 %v1901, 1.0
        %v1903 = vmul.f32 %v1902, 0.5
        %v1904 = vmul.f32 %v1891, %v1903
        %v1905 = vpack.c.bf16 %v1904, %v1904
        %s1906 = scalar_lea.vmem %s7, 32
        %v1907 = vld [vmem:[%s1906] sm:$0xf]
        %v1908 = vld [vmem:[%s1906 + $0x4] sm:$0xf]
        %v1909 = vld [vmem:[%s1906 + $0x8] sm:$0xf]
        %v1910 = vld [vmem:[%s1906 + $0xc] sm:$0xf]
        %v1911 = vld [vmem:[%s1906 + $0x10] sm:$0xf]
        %v1912 = vld [vmem:[%s1906 + $0x14] sm:$0xf]
        %v1913 = vld [vmem:[%s1906 + $0x18] sm:$0xf]
        %v1914 = vld [vmem:[%s1906 + $0x1c] sm:$0xf]
        %v1923 = vunpack.c.l.b16 %v1907
        %v1924 = vunpack.c.l.b16 %v1908
        %v1925 = vunpack.c.l.b16 %v1909
        %v1926 = vunpack.c.l.b16 %v1910
        %v1927 = vunpack.c.l.b16 %v1911
        %v1928 = vunpack.c.l.b16 %v1912
        %v1929 = vunpack.c.l.b16 %v1913
        %v1930 = vunpack.c.l.b16 %v1914
        %v1931 = vpack.c.b16 %v1924, %v1923
        %v1932 = vpack.c.b16 %v1926, %v1925
        %v1933 = vpack.c.b16 %v1928, %v1927
        %v1934 = vpack.c.b16 %v1930, %v1929
        %v1940 = vsel %vm1174, %v1905, 0
        %1942 = vmatprep.subr.bf16.mxu0 0
        %1943 = vmatpush1.bf16.msra.mxu0 0
        %1944 = vmatprep.subr.bf16.mxu0 0
        %1945 = vmatpush1.bf16.msra.mxu0 0
        %1946 = vmatprep.subr.bf16.mxu0 0
        %1947 = vmatpush1.bf16.msra.mxu0 0
        %1948 = vmatprep.subr.bf16.mxu0 0
        %1949 = vmatpush1.bf16.msra.mxu0 0
        %1950 = vmatprep.subr.bf16.mxu0 0
        %1951 = vmatpush1.bf16.msra.mxu0 %v1934
        %1952 = vmatprep.subr.bf16.mxu0 0
        %1953 = vmatpush1.bf16.msra.mxu0 %v1933
        %1954 = vmatprep.subr.bf16.mxu0 0
        %1955 = vmatpush1.bf16.msra.mxu0 %v1932
        %1956 = vmatprep.subr.bf16.mxu0 0
        %1957 = vmatpush1.bf16.msra.mxu0 %v1931
        %1958 = vmatprep.subr.bf16.mxu0 0
        %1959 = vmatpush2.bf16.msra.mxu0 0
        %1960 = vmatprep.subr.bf16.mxu0 0
        %1961 = vmatpush2.bf16.msra.mxu0 0
        %1962 = vmatprep.subr.bf16.mxu0 0
        %1963 = vmatpush2.bf16.msra.mxu0 0
        %1964 = vmatprep.subr.bf16.mxu0 0
        %1965 = vmatpush2.bf16.msra.mxu0 0
        %1966 = vmatprep.subr.bf16.mxu0 0
        %1967 = vmatpush2.bf16.msra.mxu0 0
        %1968 = vmatprep.subr.bf16.mxu0 0
        %1969 = vmatpush2.bf16.msra.mxu0 0
        %1970 = vmatprep.subr.bf16.mxu0 0
        %1971 = vmatpush2.bf16.msra.mxu0 0
        %1972 = vmatprep.subr.bf16.mxu0 0
        %1973 = vmatpush2.bf16.msra.mxu0 0
        %1974 = vmatprep.mubr.bf16.mxu0 0
        %1975 = vmatmul.mubr.bf16.gmra.mxu0 %v1940
        %v1976 = vpop.f32.mrf.mxu0
        %v1977 = vadd.f32 0.0, %v1976
        %v1978 = vpop.f32.mrf.mxu0
        %v1979 = vpop.f32.mrf.mxu0
        %v1980 = vpop.f32.mrf.mxu0
        %1981 = vdwg.mxu0
        %v1982 = vadd.f32 %v1817, %v1977
        %v1983 = vld [vmem:[%s8] sm:$0x1]
        %v1984 = vmul.f32 %v1982, %v1982
        %v1985 = vsel %vm456, %v1984, 0.0
        %1986 = vadd.xlane.f32.xlu0 %v1985
        %v1987 = vpop.xlane.xlu0 %1986
        %v1988 = vmul.f32 %v1987, %v460
        %v1989 = vadd.f32 %v1988, 1e-06
        %v1990 = vrsqrt.pop %v1989
        %v1991 = vmul.f32 %v1982, %v1990
        %v1993 = vlaneseq
        %v1994 = vshrl.u32 %v1993, 7
        %v1995 = vsub.s32 0, %v1994
        %v1996 = vrot.slane %v1983, %v1995
        %v1998 = vmul.f32 %v1991, %v1996
        %v1999 = vpack.c.bf16 %v1998, %v1998
        %v2000 = vld [vmem:[%s9] sm:$0xf]
        %v2001 = vld [vmem:[%s9 + $0x4] sm:$0xf]
        %v2002 = vld [vmem:[%s9 + $0x8] sm:$0xf]
        %v2003 = vld [vmem:[%s9 + $0xc] sm:$0xf]
        %v2008 = vunpack.c.l.b16 %v2000
        %v2009 = vunpack.c.l.b16 %v2001
        %v2010 = vunpack.c.l.b16 %v2002
        %v2011 = vunpack.c.l.b16 %v2003
        %v2012 = vpack.c.b16 %v2009, %v2008
        %v2013 = vpack.c.b16 %v2011, %v2010
        %v2017 = vsel %vm456, %v1999, 0
        %2019 = vmatprep.subr.bf16.mxu0 0
        %2020 = vmatpush1.bf16.msra.mxu0 0
        %2021 = vmatprep.subr.bf16.mxu0 0
        %2022 = vmatpush1.bf16.msra.mxu0 0
        %2023 = vmatprep.subr.bf16.mxu0 0
        %2024 = vmatpush1.bf16.msra.mxu0 0
        %2025 = vmatprep.subr.bf16.mxu0 0
        %2026 = vmatpush1.bf16.msra.mxu0 0
        %2027 = vmatprep.subr.bf16.mxu0 0
        %2028 = vmatpush1.bf16.msra.mxu0 0
        %2029 = vmatprep.subr.bf16.mxu0 0
        %2030 = vmatpush1.bf16.msra.mxu0 0
        %2031 = vmatprep.subr.bf16.mxu0 0
        %2032 = vmatpush1.bf16.msra.mxu0 %v2013
        %2033 = vmatprep.subr.bf16.mxu0 0
        %2034 = vmatpush1.bf16.msra.mxu0 %v2012
        %2035 = vmatprep.subr.bf16.mxu0 0
        %2036 = vmatpush2.bf16.msra.mxu0 0
        %2037 = vmatprep.subr.bf16.mxu0 0
        %2038 = vmatpush2.bf16.msra.mxu0 0
        %2039 = vmatprep.subr.bf16.mxu0 0
        %2040 = vmatpush2.bf16.msra.mxu0 0
        %2041 = vmatprep.subr.bf16.mxu0 0
        %2042 = vmatpush2.bf16.msra.mxu0 0
        %2043 = vmatprep.subr.bf16.mxu0 0
        %2044 = vmatpush2.bf16.msra.mxu0 0
        %2045 = vmatprep.subr.bf16.mxu0 0
        %2046 = vmatpush2.bf16.msra.mxu0 0
        %2047 = vmatprep.subr.bf16.mxu0 0
        %2048 = vmatpush2.bf16.msra.mxu0 0
        %2049 = vmatprep.subr.bf16.mxu0 0
        %2050 = vmatpush2.bf16.msra.mxu0 0
        %2051 = vmatprep.mubr.bf16.mxu0 0
        %2052 = vmatmul.mubr.bf16.gmra.mxu0 %v2017
        %v2053 = vpop.f32.mrf.mxu0
        %v2054 = vadd.f32 0.0, %v2053
        %v2055 = vpop.f32.mrf.mxu0
        %v2056 = vpop.f32.mrf.mxu0
        %v2057 = vpop.f32.mrf.mxu0
        %2058 = vdwg.mxu0
        %2059 = vst [vmem:[%s350] sm:$0xff] %v2054
        %s2060 = sand.u32 %s247, 1
        %s2061 = scalar_lea.sflag [#allocation3], %s2060
        %s2062 = sand.u32 %s247, 1
        %s2063 = smul.addr %s2062, 8
        %s2064 = scalar_lea.vmem [#allocation2], %s2063
        // Predicated region
        $region61: #{peft_causal_lm_forward.1} parent=59 // pred_check
          %p2065 = pneg %p257
        $region62: #{peft_causal_lm_forward.1} parent=59 // pred_check_branch
          %2067 = sbr.rel (%p2065) target = $region64
        $region63: #{peft_causal_lm_forward.1} parent=59 // pred_region
          %s2069 = ssub.s32 128, 128
          %2070 = vsyncadd %s2061, %s2069
          %s2071 = smul.addr %s24, 128
          %s2072 = scalar_lea.hbm %s10, %s2071
          %s2074 = sshll.u32 %s2064, 4
          %s2075 = int_to_ptr.vmem [resolvable:$true] %s2074
          %2077 = dma.vmem_to_hbm [thread:$0]  %s2075, 128, %s2072, %s2061
        $region64: #{peft_causal_lm_forward.1} parent=59 // pred_fallthru
          _
      $region60: #{peft_causal_lm_forward.1} parent=5 // pred_fallthru
        _
      %p2078 = scmp.le.s32.totalorder 2, %s19
      // Predicated region
      $region65: #{peft_causal_lm_forward.1} parent=5 // pred_check
        %p2079 = pneg %p2078
      $region66: #{peft_causal_lm_forward.1} parent=5 // pred_check_branch
        %2081 = sbr.rel (%p2079) target = $region68
      $region67: #{peft_causal_lm_forward.1} parent=5 // pred_region
        %s2082 = ssub.s32 %s19, 2
        // Predicated region
        $region69: #{peft_causal_lm_forward.1} parent=67 // pred_check
          %p2083 = pneg %p263
        $region70: #{peft_causal_lm_forward.1} parent=67 // pred_check_branch
          %2085 = sbr.rel (%p2083) target = $region72
        $region71: #{peft_causal_lm_forward.1} parent=67 // pred_region
          %s2086 = sand.u32 %s248, 1
          %s2087 = scalar_lea.sflag [#allocation3], %s2086
          %s2088 = sand.u32 %s248, 1
          %s2089 = smul.addr %s2088, 8
          %s2090 = scalar_lea.vmem [#allocation2], %s2089
          %2091 = dma.done %s2087, 128
        $region72: #{peft_causal_lm_forward.1} parent=67 // pred_fallthru
          _
      $region68: #{peft_causal_lm_forward.1} parent=5 // pred_fallthru
        _
    $region6: #{peft_causal_lm_forward.1} parent=1 // loop_footer
      %s23 = sadd.s32 1, %s19
    $region7: #{peft_causal_lm_forward.1} parent=1 // loop_footer_branch
      %18 = sbr.rel target = $region3
    $region8: #{peft_causal_lm_forward.1} parent=1 // loop_exit
      _
    %2092 = vsyncpa [#allocation3], 1
    %s2093 = scalar_lea.sflag [#allocation3], 1
    %2094 = vsyncpa %s2093, 1

</llo_original>
